<compile_context>
chip_gen: v5e
topology: v5e:2x2
jax: 0.10.0
libtpu: 0.0.40
codegen_flags: <defaults>
</compile_context>

<pallas_src>
import functools

import jax
import jax.numpy as jnp
from jax import lax
from jax.experimental import pallas as pl
from jax.experimental.pallas import tpu as pltpu

LANE = 128  # TPU vreg lane width; channel-like dims are padded to this.


def _round_up(x, m):
    return (x + m - 1) // m * m


def _conv_head_kernel(x_ref, wtap_ref, bconv_ref, whead_ref, bhead_ref,
                      out_ref, acc_ref, *, th, h, w, c_in):
    """One grid step = (batch item n, output-row band t).

    x_ref:     (1, H+2, W+2, C_in)  bf16  padded NHWC image for batch item n
    wtap_ref:  (9, C_in, C_OUT_P)   bf16  conv weight, one (C_in, C_OUT_P) slab per tap
    bconv_ref: (1, C_OUT_P)         f32
    whead_ref: (C_OUT_P, NC_P)      bf16
    bhead_ref: (1, NC_P)            f32
    out_ref:   (1, 1, NC_P)         f32   logits for batch item n
    acc_ref:   (1, C_OUT_P)         f32   channel-sum accumulator (global avg pool)
    """
    t = pl.program_id(1)
    n_t = pl.num_programs(1)
    row0 = t * th

    # Init the pooling accumulator at the first row band of each batch item.
    @pl.when(t == 0)
    def _():
        acc_ref[...] = jnp.zeros_like(acc_ref)

    # In-kernel im2col: 3x3 same conv as 9 shifted-tap matmuls, f32 accumulate.
    # With tiny C_in each tap matmul has K = C_in; this trades some MXU row
    # pushes for not needing an unaligned lane-dim concatenation of the taps.
    # TODO(synk): fuse the 9 taps into one (TH*W, 9*C_in) matmul once an
    # unaligned minor-dim concat is worth the lowering risk.
    c_out_p = wtap_ref.shape[-1]
    conv = jnp.zeros((th * w, c_out_p), jnp.float32)
    for kh in range(3):
        for kw in range(3):
            tap = x_ref[0, pl.ds(row0 + kh, th), pl.ds(kw, w), :]   # (TH, W, C_in)
            tap = tap.reshape(th * w, c_in)                         # minor dim unchanged
            conv = conv + jnp.dot(tap, wtap_ref[kh * 3 + kw],
                                  preferred_element_type=jnp.float32)

    act = jnp.maximum(conv + bconv_ref[...], 0.0)            # bias + ReLU, f32
    acc_ref[...] += jnp.sum(act, axis=0, keepdims=True)      # partial channel sums

    # Epilogue: global average pool + linear classifier head.
    @pl.when(t == n_t - 1)
    def _():
        pooled = acc_ref[...] * (1.0 / float(h * w))          # (1, C_OUT_P) f32
        logits = jnp.dot(pooled.astype(whead_ref.dtype), whead_ref[...],
                         preferred_element_type=jnp.float32) + bhead_ref[...]
        out_ref[...] = logits.reshape(1, 1, -1).astype(out_ref.dtype)


def my_model_forward(x_nchw, kernel_params):
    """Forward: 3x3 same conv -> ReLU -> global avg pool -> linear head."""
    w_taps, b_conv, w_head, b_head = kernel_params
    n, c_in, h, w = x_nchw.shape
    c_out_p = w_taps.shape[-1]
    nc_p = w_head.shape[-1]

    th = 8 if h % 8 == 0 else h          # output rows per grid step
    n_t = h // th

    # NCHW -> padded NHWC in bf16: raw-image bytes only (no 9x HBM expansion).
    x_nhwc = jnp.transpose(x_nchw, (0, 2, 3, 1))
    x_pad = jnp.pad(x_nhwc, ((0, 0), (1, 1), (1, 1), (0, 0))).astype(jnp.bfloat16)

    kernel = functools.partial(_conv_head_kernel, th=th, h=h, w=w, c_in=c_in)

    flops = 2 * n * h * w * (9 * c_in) * c_out_p + 2 * n * c_out_p * nc_p
    bytes_accessed = (x_pad.size * 2 + w_taps.size * 2 + b_conv.size * 4
                      + w_head.size * 2 + b_head.size * 4 + n * nc_p * 4)

    # TODO(synk): for large images, switch the image BlockSpec to halo-tiled
    # row bands (pl.Element) instead of one whole padded image per batch item.
    out = pl.pallas_call(
        kernel,
        out_shape=jax.ShapeDtypeStruct((n, 1, nc_p), jnp.float32),
        grid_spec=pltpu.PrefetchScalarGridSpec(
            num_scalar_prefetch=0,
            grid=(n, n_t),
            in_specs=[
                pl.BlockSpec((1, h + 2, w + 2, c_in), lambda i, t: (i, 0, 0, 0)),
                pl.BlockSpec((9, c_in, c_out_p), lambda i, t: (0, 0, 0)),
                pl.BlockSpec((1, c_out_p), lambda i, t: (0, 0)),
                pl.BlockSpec((c_out_p, nc_p), lambda i, t: (0, 0)),
                pl.BlockSpec((1, nc_p), lambda i, t: (0, 0)),
            ],
            out_specs=pl.BlockSpec((1, 1, nc_p), lambda i, t: (i, 0, 0)),
            scratch_shapes=[pltpu.VMEM((1, c_out_p), jnp.float32)],
        ),
        compiler_params=pltpu.CompilerParams(
            dimension_semantics=("parallel", "arbitrary"),
            vmem_limit_bytes=32 * 1024 * 1024,
        ),
        cost_estimate=pl.CostEstimate(flops=flops, transcendentals=0,
                                      bytes_accessed=bytes_accessed),
    )(x_pad, w_taps, b_conv, w_head, b_head)
    return out.reshape(n, nc_p)


def init_params(key, c_in, c_out, num_classes):
    """PyTorch-layout weights plus kernel-friendly (lane-padded bf16) packing."""
    k1, k2, k3, k4 = jax.random.split(key, 4)
    w_conv = jax.random.normal(k1, (c_out, c_in, 3, 3), jnp.float32) * 0.1   # OIHW
    b_conv = jax.random.normal(k2, (c_out,), jnp.float32) * 0.01
    w_head = jax.random.normal(k3, (c_out, num_classes), jnp.float32) * 0.1
    b_head = jax.random.normal(k4, (num_classes,), jnp.float32) * 0.01

    c_out_p = _round_up(c_out, LANE)
    nc_p = _round_up(num_classes, LANE)

    # (C_out, C_in, 3, 3) -> (3, 3, C_in, C_out) -> (9, C_in, C_out); zero-pad
    # the lane (output-channel / class) dims to 128. Zero padding is exact:
    # padded channels are ReLU(0)=0 and feed zero head weights.
    w_taps = jnp.transpose(w_conv, (2, 3, 1, 0)).reshape(9, c_in, c_out)
    w_taps = jnp.pad(w_taps, ((0, 0), (0, 0), (0, c_out_p - c_out)))
    b_conv_p = jnp.pad(b_conv, (0, c_out_p - c_out)).reshape(1, c_out_p)
    w_head_p = jnp.pad(w_head, ((0, c_out_p - c_out), (0, nc_p - num_classes)))
    b_head_p = jnp.pad(b_head, (0, nc_p - num_classes)).reshape(1, nc_p)

    kernel_params = (w_taps.astype(jnp.bfloat16), b_conv_p,
                     w_head_p.astype(jnp.bfloat16), b_head_p)
    torch_params = (w_conv, b_conv, w_head, b_head)
    return kernel_params, torch_params


def reference_forward(x_nchw, torch_params):
    """Pure-JAX reference matching the kernel's bf16-input / f32-accum math."""
    w_conv, b_conv, w_head, b_head = torch_params
    x = x_nchw.astype(jnp.bfloat16).astype(jnp.float32)
    wc = w_conv.astype(jnp.bfloat16).astype(jnp.float32)
    wh = w_head.astype(jnp.bfloat16).astype(jnp.float32)
    y = lax.conv_general_dilated(
        x, wc, window_strides=(1, 1), padding=((1, 1), (1, 1)),
        dimension_numbers=("NCHW", "OIHW", "NCHW"),
        precision=lax.Precision.HIGHEST)
    y = jnp.maximum(y + b_conv.reshape(1, -1, 1, 1), 0.0)
    pooled = y.mean(axis=(2, 3))
    pooled = pooled.astype(jnp.bfloat16).astype(jnp.float32)
    return jnp.dot(pooled, wh, precision=lax.Precision.HIGHEST) + b_head.reshape(1, -1)


if __name__ == "__main__":
    key = jax.random.PRNGKey(0)
    kx, kp = jax.random.split(key)

    # Small shapes consistent with an image-classifier forward pass.
    N, C_IN, H, W = 2, 4, 16, 16
    C_OUT, NUM_CLASSES = 32, 10

    x = jax.random.normal(kx, (N, C_IN, H, W), jnp.float32)   # NCHW, like PyTorch
    kernel_params, torch_params = init_params(kp, C_IN, C_OUT, NUM_CLASSES)

    logits_full = my_model_forward(x, kernel_params)          # (N, 128), lane-dense
    jax.block_until_ready(logits_full)
    logits = logits_full[:, :NUM_CLASSES]                     # strip class padding

    ref = reference_forward(x, torch_params)
    assert logits.shape == (N, NUM_CLASSES)
    assert jnp.all(jnp.isfinite(logits))
    assert jnp.allclose(logits, ref, atol=2e-2, rtol=2e-2), (
        float(jnp.max(jnp.abs(logits - ref))))
    print("KERNEL_OK")
</pallas_src>

<mosaic_0001>
module attributes {stable_mosaic.version = 11 : i64} {
  func.func @_conv_head_kernel(%arg0: i32, %arg1: i32, %arg2: memref<1x18x18x4xbf16, #tpu.memory_space<vmem>>, %arg3: memref<9x4x128xbf16, #tpu.memory_space<vmem>>, %arg4: memref<1x128xf32, #tpu.memory_space<vmem>>, %arg5: memref<128x128xbf16, #tpu.memory_space<vmem>>, %arg6: memref<1x128xf32, #tpu.memory_space<vmem>>, %arg7: memref<1x1x128xf32, #tpu.memory_space<vmem>>, %arg8: memref<1x128xf32, #tpu.memory_space<vmem>>) attributes {dimension_semantics = [#tpu.dimension_semantics<parallel>, #tpu.dimension_semantics<arbitrary>], iteration_bounds = array<i64: 2, 2>, scalar_prefetch = 0 : i64, scratch_operands = 1 : i64, tpu.core_type = #tpu.core_type<tc>, window_params = [{transform_indices = @transform_0, window_bounds = array<i64: 1, 18, 18, 4>}, {pipeline_mode = #tpu.pipeline_mode<synchronous>, transform_indices = @transform_1, window_bounds = array<i64: 9, 4, 128>}, {pipeline_mode = #tpu.pipeline_mode<synchronous>, transform_indices = @transform_2, window_bounds = array<i64: 1, 128>}, {pipeline_mode = #tpu.pipeline_mode<synchronous>, transform_indices = @transform_3, window_bounds = array<i64: 128, 128>}, {pipeline_mode = #tpu.pipeline_mode<synchronous>, transform_indices = @transform_4, window_bounds = array<i64: 1, 128>}, {transform_indices = @transform_5, window_bounds = array<i64: 1, 1, 128>}]} {
    %c8_i32 = arith.constant 8 : i32
    %0 = arith.muli %arg1, %c8_i32 : i32
    %c0_i32 = arith.constant 0 : i32
    %1 = arith.cmpi eq, %arg1, %c0_i32 : i32
    %2 = arith.extui %1 : i1 to i32
    %c0_i32_0 = arith.constant 0 : i32
    %3 = arith.cmpi ne, %2, %c0_i32_0 : i32
    scf.if %3 {
      %cst_72 = arith.constant 0.000000e+00 : f32
      %99 = vector.broadcast %cst_72 : f32 to vector<1x128xf32>
      %c0_73 = arith.constant 0 : index
      %c0_74 = arith.constant 0 : index
      %100 = vector.load %arg8[%c0_73, %c0_74] : memref<1x128xf32, #tpu.memory_space<vmem>>, vector<1x128xf32>
      tpu.vector_store %arg8[%c0_73, %c0_74], %99 {strides = array<i32>} : memref<1x128xf32, #tpu.memory_space<vmem>>, vector<1x128xf32>,
    } else {
    }
    %cst = arith.constant 0.000000e+00 : f32
    %4 = vector.broadcast %cst : f32 to vector<128x128xf32>
    %c0_i32_1 = arith.constant 0 : i32
    %5 = arith.addi %0, %c0_i32_1 : i32
    %c0 = arith.constant 0 : index
    %6 = arith.index_cast %5 : i32 to index
    %c0_2 = arith.constant 0 : index
    %c0_3 = arith.constant 0 : index
    %7 = vector.load %arg2[%c0, %6, %c0_2, %c0_3] : memref<1x18x18x4xbf16, #tpu.memory_space<vmem>>, vector<1x8x16x4xbf16>
    %8 = vector.shape_cast %7 : vector<1x8x16x4xbf16> to vector<8x16x4xbf16>
    %9 = vector.shape_cast %8 : vector<8x16x4xbf16> to vector<128x4xbf16>
    %c0_4 = arith.constant 0 : index
    %c0_5 = arith.constant 0 : index
    %c0_6 = arith.constant 0 : index
    %10 = vector.load %arg3[%c0_4, %c0_5, %c0_6] : memref<9x4x128xbf16, #tpu.memory_space<vmem>>, vector<1x4x128xbf16>
    %11 = vector.shape_cast %10 : vector<1x4x128xbf16> to vector<4x128xbf16>
    %cst_7 = arith.constant dense<0.000000e+00> : vector<128x128xf32>
    %12 = tpu.matmul %9, %11, %cst_7 {dimension_numbers = #tpu.dot_dimension_numbers<[1], [0], [0], [1], [0, 0, 1, 1], [], []>} : vector<128x4xbf16>, vector<4x128xbf16>, vector<128x128xf32> -> vector<128x128xf32>
    %13 = arith.addf %4, %12 : vector<128x128xf32>
    %c0_i32_8 = arith.constant 0 : i32
    %14 = arith.addi %0, %c0_i32_8 : i32
    %c0_9 = arith.constant 0 : index
    %15 = arith.index_cast %14 : i32 to index
    %c1 = arith.constant 1 : index
    %c0_10 = arith.constant 0 : index
    %16 = vector.load %arg2[%c0_9, %15, %c1, %c0_10] : memref<1x18x18x4xbf16, #tpu.memory_space<vmem>>, vector<1x8x16x4xbf16>
    %17 = vector.shape_cast %16 : vector<1x8x16x4xbf16> to vector<8x16x4xbf16>
    %18 = vector.shape_cast %17 : vector<8x16x4xbf16> to vector<128x4xbf16>
    %c1_11 = arith.constant 1 : index
    %c0_12 = arith.constant 0 : index
    %c0_13 = arith.constant 0 : index
    %19 = vector.load %arg3[%c1_11, %c0_12, %c0_13] : memref<9x4x128xbf16, #tpu.memory_space<vmem>>, vector<1x4x128xbf16>
    %20 = vector.shape_cast %19 : vector<1x4x128xbf16> to vector<4x128xbf16>
    %cst_14 = arith.constant dense<0.000000e+00> : vector<128x128xf32>
    %21 = tpu.matmul %18, %20, %cst_14 {dimension_numbers = #tpu.dot_dimension_numbers<[1], [0], [0], [1], [0, 0, 1, 1], [], []>} : vector<128x4xbf16>, vector<4x128xbf16>, vector<128x128xf32> -> vector<128x128xf32>
    %22 = arith.addf %13, %21 : vector<128x128xf32>
    %c0_i32_15 = arith.constant 0 : i32
    %23 = arith.addi %0, %c0_i32_15 : i32
    %c0_16 = arith.constant 0 : index
    %24 = arith.index_cast %23 : i32 to index
    %c2 = arith.constant 2 : index
    %c0_17 = arith.constant 0 : index
    %25 = vector.load %arg2[%c0_16, %24, %c2, %c0_17] : memref<1x18x18x4xbf16, #tpu.memory_space<vmem>>, vector<1x8x16x4xbf16>
    %26 = vector.shape_cast %25 : vector<1x8x16x4xbf16> to vector<8x16x4xbf16>
    %27 = vector.shape_cast %26 : vector<8x16x4xbf16> to vector<128x4xbf16>
    %c2_18 = arith.constant 2 : index
    %c0_19 = arith.constant 0 : index
    %c0_20 = arith.constant 0 : index
    %28 = vector.load %arg3[%c2_18, %c0_19, %c0_20] : memref<9x4x128xbf16, #tpu.memory_space<vmem>>, vector<1x4x128xbf16>
    %29 = vector.shape_cast %28 : vector<1x4x128xbf16> to vector<4x128xbf16>
    %cst_21 = arith.constant dense<0.000000e+00> : vector<128x128xf32>
    %30 = tpu.matmul %27, %29, %cst_21 {dimension_numbers = #tpu.dot_dimension_numbers<[1], [0], [0], [1], [0, 0, 1, 1], [], []>} : vector<128x4xbf16>, vector<4x128xbf16>, vector<128x128xf32> -> vector<128x128xf32>
    %31 = arith.addf %22, %30 : vector<128x128xf32>
    %c1_i32 = arith.constant 1 : i32
    %32 = arith.addi %0, %c1_i32 : i32
    %c0_22 = arith.constant 0 : index
    %33 = arith.index_cast %32 : i32 to index
    %c0_23 = arith.constant 0 : index
    %c0_24 = arith.constant 0 : index
    %34 = vector.load %arg2[%c0_22, %33, %c0_23, %c0_24] : memref<1x18x18x4xbf16, #tpu.memory_space<vmem>>, vector<1x8x16x4xbf16>
    %35 = vector.shape_cast %34 : vector<1x8x16x4xbf16> to vector<8x16x4xbf16>
    %36 = vector.shape_cast %35 : vector<8x16x4xbf16> to vector<128x4xbf16>
    %c3 = arith.constant 3 : index
    %c0_25 = arith.constant 0 : index
    %c0_26 = arith.constant 0 : index
    %37 = vector.load %arg3[%c3, %c0_25, %c0_26] : memref<9x4x128xbf16, #tpu.memory_space<vmem>>, vector<1x4x128xbf16>
    %38 = vector.shape_cast %37 : vector<1x4x128xbf16> to vector<4x128xbf16>
    %cst_27 = arith.constant dense<0.000000e+00> : vector<128x128xf32>
    %39 = tpu.matmul %36, %38, %cst_27 {dimension_numbers = #tpu.dot_dimension_numbers<[1], [0], [0], [1], [0, 0, 1, 1], [], []>} : vector<128x4xbf16>, vector<4x128xbf16>, vector<128x128xf32> -> vector<128x128xf32>
    %40 = arith.addf %31, %39 : vector<128x128xf32>
    %c1_i32_28 = arith.constant 1 : i32
    %41 = arith.addi %0, %c1_i32_28 : i32
    %c0_29 = arith.constant 0 : index
    %42 = arith.index_cast %41 : i32 to index
    %c1_30 = arith.constant 1 : index
    %c0_31 = arith.constant 0 : index
    %43 = vector.load %arg2[%c0_29, %42, %c1_30, %c0_31] : memref<1x18x18x4xbf16, #tpu.memory_space<vmem>>, vector<1x8x16x4xbf16>
    %44 = vector.shape_cast %43 : vector<1x8x16x4xbf16> to vector<8x16x4xbf16>
    %45 = vector.shape_cast %44 : vector<8x16x4xbf16> to vector<128x4xbf16>
    %c4 = arith.constant 4 : index
    %c0_32 = arith.constant 0 : index
    %c0_33 = arith.constant 0 : index
    %46 = vector.load %arg3[%c4, %c0_32, %c0_33] : memref<9x4x128xbf16, #tpu.memory_space<vmem>>, vector<1x4x128xbf16>
    %47 = vector.shape_cast %46 : vector<1x4x128xbf16> to vector<4x128xbf16>
    %cst_34 = arith.constant dense<0.000000e+00> : vector<128x128xf32>
    %48 = tpu.matmul %45, %47, %cst_34 {dimension_numbers = #tpu.dot_dimension_numbers<[1], [0], [0], [1], [0, 0, 1, 1], [], []>} : vector<128x4xbf16>, vector<4x128xbf16>, vector<128x128xf32> -> vector<128x128xf32>
    %49 = arith.addf %40, %48 : vector<128x128xf32>
    %c1_i32_35 = arith.constant 1 : i32
    %50 = arith.addi %0, %c1_i32_35 : i32
    %c0_36 = arith.constant 0 : index
    %51 = arith.index_cast %50 : i32 to index
    %c2_37 = arith.constant 2 : index
    %c0_38 = arith.constant 0 : index
    %52 = vector.load %arg2[%c0_36, %51, %c2_37, %c0_38] : memref<1x18x18x4xbf16, #tpu.memory_space<vmem>>, vector<1x8x16x4xbf16>
    %53 = vector.shape_cast %52 : vector<1x8x16x4xbf16> to vector<8x16x4xbf16>
    %54 = vector.shape_cast %53 : vector<8x16x4xbf16> to vector<128x4xbf16>
    %c5 = arith.constant 5 : index
    %c0_39 = arith.constant 0 : index
    %c0_40 = arith.constant 0 : index
    %55 = vector.load %arg3[%c5, %c0_39, %c0_40] : memref<9x4x128xbf16, #tpu.memory_space<vmem>>, vector<1x4x128xbf16>
    %56 = vector.shape_cast %55 : vector<1x4x128xbf16> to vector<4x128xbf16>
    %cst_41 = arith.constant dense<0.000000e+00> : vector<128x128xf32>
    %57 = tpu.matmul %54, %56, %cst_41 {dimension_numbers = #tpu.dot_dimension_numbers<[1], [0], [0], [1], [0, 0, 1, 1], [], []>} : vector<128x4xbf16>, vector<4x128xbf16>, vector<128x128xf32> -> vector<128x128xf32>
    %58 = arith.addf %49, %57 : vector<128x128xf32>
    %c2_i32 = arith.constant 2 : i32
    %59 = arith.addi %0, %c2_i32 : i32
    %c0_42 = arith.constant 0 : index
    %60 = arith.index_cast %59 : i32 to index
    %c0_43 = arith.constant 0 : index
    %c0_44 = arith.constant 0 : index
    %61 = vector.load %arg2[%c0_42, %60, %c0_43, %c0_44] : memref<1x18x18x4xbf16, #tpu.memory_space<vmem>>, vector<1x8x16x4xbf16>
    %62 = vector.shape_cast %61 : vector<1x8x16x4xbf16> to vector<8x16x4xbf16>
    %63 = vector.shape_cast %62 : vector<8x16x4xbf16> to vector<128x4xbf16>
    %c6 = arith.constant 6 : index
    %c0_45 = arith.constant 0 : index
    %c0_46 = arith.constant 0 : index
    %64 = vector.load %arg3[%c6, %c0_45, %c0_46] : memref<9x4x128xbf16, #tpu.memory_space<vmem>>, vector<1x4x128xbf16>
    %65 = vector.shape_cast %64 : vector<1x4x128xbf16> to vector<4x128xbf16>
    %cst_47 = arith.constant dense<0.000000e+00> : vector<128x128xf32>
    %66 = tpu.matmul %63, %65, %cst_47 {dimension_numbers = #tpu.dot_dimension_numbers<[1], [0], [0], [1], [0, 0, 1, 1], [], []>} : vector<128x4xbf16>, vector<4x128xbf16>, vector<128x128xf32> -> vector<128x128xf32>
    %67 = arith.addf %58, %66 : vector<128x128xf32>
    %c2_i32_48 = arith.constant 2 : i32
    %68 = arith.addi %0, %c2_i32_48 : i32
    %c0_49 = arith.constant 0 : index
    %69 = arith.index_cast %68 : i32 to index
    %c1_50 = arith.constant 1 : index
    %c0_51 = arith.constant 0 : index
    %70 = vector.load %arg2[%c0_49, %69, %c1_50, %c0_51] : memref<1x18x18x4xbf16, #tpu.memory_space<vmem>>, vector<1x8x16x4xbf16>
    %71 = vector.shape_cast %70 : vector<1x8x16x4xbf16> to vector<8x16x4xbf16>
    %72 = vector.shape_cast %71 : vector<8x16x4xbf16> to vector<128x4xbf16>
    %c7 = arith.constant 7 : index
    %c0_52 = arith.constant 0 : index
    %c0_53 = arith.constant 0 : index
    %73 = vector.load %arg3[%c7, %c0_52, %c0_53] : memref<9x4x128xbf16, #tpu.memory_space<vmem>>, vector<1x4x128xbf16>
    %74 = vector.shape_cast %73 : vector<1x4x128xbf16> to vector<4x128xbf16>
    %cst_54 = arith.constant dense<0.000000e+00> : vector<128x128xf32>
    %75 = tpu.matmul %72, %74, %cst_54 {dimension_numbers = #tpu.dot_dimension_numbers<[1], [0], [0], [1], [0, 0, 1, 1], [], []>} : vector<128x4xbf16>, vector<4x128xbf16>, vector<128x128xf32> -> vector<128x128xf32>
    %76 = arith.addf %67, %75 : vector<128x128xf32>
    %c2_i32_55 = arith.constant 2 : i32
    %77 = arith.addi %0, %c2_i32_55 : i32
    %c0_56 = arith.constant 0 : index
    %78 = arith.index_cast %77 : i32 to index
    %c2_57 = arith.constant 2 : index
    %c0_58 = arith.constant 0 : index
    %79 = vector.load %arg2[%c0_56, %78, %c2_57, %c0_58] : memref<1x18x18x4xbf16, #tpu.memory_space<vmem>>, vector<1x8x16x4xbf16>
    %80 = vector.shape_cast %79 : vector<1x8x16x4xbf16> to vector<8x16x4xbf16>
    %81 = vector.shape_cast %80 : vector<8x16x4xbf16> to vector<128x4xbf16>
    %c8 = arith.constant 8 : index
    %c0_59 = arith.constant 0 : index
    %c0_60 = arith.constant 0 : index
    %82 = vector.load %arg3[%c8, %c0_59, %c0_60] : memref<9x4x128xbf16, #tpu.memory_space<vmem>>, vector<1x4x128xbf16>
    %83 = vector.shape_cast %82 : vector<1x4x128xbf16> to vector<4x128xbf16>
    %cst_61 = arith.constant dense<0.000000e+00> : vector<128x128xf32>
    %84 = tpu.matmul %81, %83, %cst_61 {dimension_numbers = #tpu.dot_dimension_numbers<[1], [0], [0], [1], [0, 0, 1, 1], [], []>} : vector<128x4xbf16>, vector<4x128xbf16>, vector<128x128xf32> -> vector<128x128xf32>
    %85 = arith.addf %76, %84 : vector<128x128xf32>
    %c0_62 = arith.constant 0 : index
    %c0_63 = arith.constant 0 : index
    %86 = vector.load %arg4[%c0_62, %c0_63] : memref<1x128xf32, #tpu.memory_space<vmem>>, vector<1x128xf32>
    %87 = vector.broadcast %86 : vector<1x128xf32> to vector<128x128xf32>
    %88 = arith.addf %85, %87 : vector<128x128xf32>
    %cst_64 = arith.constant 0.000000e+00 : f32
    %89 = vector.broadcast %cst_64 : f32 to vector<128x128xf32>
    %90 = arith.maximumf %88, %89 : vector<128x128xf32>
    %c0_65 = arith.constant 0 : index
    %c0_66 = arith.constant 0 : index
    %91 = vector.load %arg8[%c0_65, %c0_66] : memref<1x128xf32, #tpu.memory_space<vmem>>, vector<1x128xf32>
    %cst_67 = arith.constant dense<0.000000e+00> : vector<128xf32>
    %92 = vector.multi_reduction <add>, %90, %cst_67 [0] : vector<128x128xf32> to vector<128xf32>
    %93 = vector.shape_cast %92 : vector<128xf32> to vector<1x128xf32>
    %94 = arith.addf %91, %93 : vector<1x128xf32>
    %c0_68 = arith.constant 0 : index
    %c0_69 = arith.constant 0 : index
    %95 = vector.load %arg8[%c0_68, %c0_69] : memref<1x128xf32, #tpu.memory_space<vmem>>, vector<1x128xf32>
    tpu.vector_store %arg8[%c0_68, %c0_69], %94 {strides = array<i32>} : memref<1x128xf32, #tpu.memory_space<vmem>>, vector<1x128xf32>,
    %c1_i32_70 = arith.constant 1 : i32
    %96 = arith.cmpi eq, %arg1, %c1_i32_70 : i32
    %97 = arith.extui %96 : i1 to i32
    %c0_i32_71 = arith.constant 0 : i32
    %98 = arith.cmpi ne, %97, %c0_i32_71 : i32
    scf.if %98 {
      %c0_72 = arith.constant 0 : index
      %c0_73 = arith.constant 0 : index
      %99 = vector.load %arg8[%c0_72, %c0_73] : memref<1x128xf32, #tpu.memory_space<vmem>>, vector<1x128xf32>
      %cst_74 = arith.constant 3.906250e-03 : f32
      %100 = vector.broadcast %cst_74 : f32 to vector<1x128xf32>
      %101 = arith.mulf %99, %100 : vector<1x128xf32>
      %102 = arith.truncf %101 : vector<1x128xf32> to vector<1x128xbf16>
      %c0_75 = arith.constant 0 : index
      %c0_76 = arith.constant 0 : index
      %103 = vector.load %arg5[%c0_75, %c0_76] : memref<128x128xbf16, #tpu.memory_space<vmem>>, vector<128x128xbf16>
      %cst_77 = arith.constant dense<0.000000e+00> : vector<1x128xf32>
      %104 = tpu.matmul %102, %103, %cst_77 {dimension_numbers = #tpu.dot_dimension_numbers<[1], [0], [0], [1], [0, 0, 1, 1], [], []>} : vector<1x128xbf16>, vector<128x128xbf16>, vector<1x128xf32> -> vector<1x128xf32>
      %c0_78 = arith.constant 0 : index
      %c0_79 = arith.constant 0 : index
      %105 = vector.load %arg6[%c0_78, %c0_79] : memref<1x128xf32, #tpu.memory_space<vmem>>, vector<1x128xf32>
      %106 = arith.addf %104, %105 : vector<1x128xf32>
      %107 = vector.shape_cast %106 : vector<1x128xf32> to vector<1x1x128xf32>
      %c0_80 = arith.constant 0 : index
      %c0_81 = arith.constant 0 : index
      %c0_82 = arith.constant 0 : index
      %108 = vector.load %arg7[%c0_80, %c0_81, %c0_82] : memref<1x1x128xf32, #tpu.memory_space<vmem>>, vector<1x1x128xf32>
      tpu.vector_store %arg7[%c0_80, %c0_81, %c0_82], %107 {strides = array<i32>} : memref<1x1x128xf32, #tpu.memory_space<vmem>>, vector<1x1x128xf32>,
    } else {
    }
    return
  }
  func.func @transform_0(%arg0: i32, %arg1: i32) -> (i32, i32, i32, i32) {
    %c0_i32 = arith.constant 0 : i32
    %c0_i32_0 = arith.constant 0 : i32
    %c0_i32_1 = arith.constant 0 : i32
    %c0_i32_2 = arith.constant 0 : i32
    return %arg0, %c0_i32, %c0_i32_0, %c0_i32_1 : i32, i32, i32, i32
  }
  func.func @transform_1(%arg0: i32, %arg1: i32) -> (i32, i32, i32) {
    %c0_i32 = arith.constant 0 : i32
    %c0_i32_0 = arith.constant 0 : i32
    %c0_i32_1 = arith.constant 0 : i32
    %c0_i32_2 = arith.constant 0 : i32
    return %c0_i32, %c0_i32_0, %c0_i32_1 : i32, i32, i32
  }
  func.func @transform_2(%arg0: i32, %arg1: i32) -> (i32, i32) {
    %c0_i32 = arith.constant 0 : i32
    %c0_i32_0 = arith.constant 0 : i32
    %c0_i32_1 = arith.constant 0 : i32
    return %c0_i32, %c0_i32_0 : i32, i32
  }
  func.func @transform_3(%arg0: i32, %arg1: i32) -> (i32, i32) {
    %c0_i32 = arith.constant 0 : i32
    %c0_i32_0 = arith.constant 0 : i32
    %c0_i32_1 = arith.constant 0 : i32
    return %c0_i32, %c0_i32_0 : i32, i32
  }
  func.func @transform_4(%arg0: i32, %arg1: i32) -> (i32, i32) {
    %c0_i32 = arith.constant 0 : i32
    %c0_i32_0 = arith.constant 0 : i32
    %c0_i32_1 = arith.constant 0 : i32
    return %c0_i32, %c0_i32_0 : i32, i32
  }
  func.func @transform_5(%arg0: i32, %arg1: i32) -> (i32, i32, i32) {
    %c0_i32 = arith.constant 0 : i32
    %c0_i32_0 = arith.constant 0 : i32
    %c0_i32_1 = arith.constant 0 : i32
    return %arg0, %c0_i32, %c0_i32_0 : i32, i32, i32
  }
}

</mosaic_0001>

<llo_original>
// kernel: tpu_custom_call.1
$region0: #{tpu_custom_call.1}
  #allocation0 [shape = 'u32[]', space=smem, size = 0x4, offset = 0x4, fixed_abs, tag = 'smem constant byte address 0x4 - core index']
  #allocation1 [shape = 'u32[72,128]{1,0:T(1,128)}', space=vmem, size = 0x9000, scoped, tag = 'internal scratch']
  #allocation2 [shape = 'f32[1,128]{1,0:T(1,128)}', space=vmem, size = 0x200, scoped, tag = 'scratch operand']
  %s0 = inlined_call_operand.vmem [shape: bf16[2,18,18,4], index: 0, kind: input, shape index: {}]
  %s1 = inlined_call_operand.vmem [shape: bf16[9,4,128], index: 1, kind: input, shape index: {}]
  %s2 = inlined_call_operand.vmem [shape: f32[1,128], index: 2, kind: input, shape index: {}]
  %s3 = inlined_call_operand.vmem [shape: bf16[128,128], index: 3, kind: input, shape index: {}]
  %s4 = inlined_call_operand.vmem [shape: f32[1,128], index: 4, kind: input, shape index: {}]
  %s5 = inlined_call_operand.hbm [shape: f32[2,1,128], index: 5, kind: output, shape index: {}]
  %s6 = sld [smem:[#allocation0]]
  $region61: #{tpu_custom_call.1} parent=0
    _
  %s8 = ssub.s32 1, %s6
  %s9 = scalar_select 0, %s8, %s6
  $region1: #{tpu_custom_call.1} parent=0
    #allocation3 [shape = 'u8[1024]{0}', space=vmem, size = 0x400, scoped, tag = 'output window, operand 0']
    #allocation4 [shape = 's32[2]{0}', space=sflag, size = 0x8, scoped, tag = 'scoped memory for tpu_custom_call.1']
    %10 = vsyncpa [#allocation4], 0
    %s11 = scalar_lea.sflag [#allocation4], 1
    %12 = vsyncpa %s11, 0
    loop: start=0, step=1, limit=6
    $region2: #{tpu_custom_call.1} parent=1 // loop_pre_header
      _
    $region3: #{tpu_custom_call.1} parent=1 // loop_header
      %s14 = sphi 0, %s18
      %p15 = scmp.ge.s32.totalorder %s14, 6
      %s21 = sphi 0, %s33
      %s22 = sphi 0, %s29
      %s23 = sphi 0, %s21
      %s24 = sphi 0, %s22
      %s25 = sphi 0, %s23
      %s26 = sphi 0, %s24
      %s36 = sphi 0, %s38
      %s39 = sphi 0, %s36
      %s40 = sphi 0, %s39
      %s56 = sphi 0, %s40
      %s60 = sphi 0, %s60
      %s62 = sphi 0, %s60
      %s63 = sphi 0, %s62
      %s77 = sphi 0, %s63
      %s81 = sphi 0, %s81
      %s83 = sphi 0, %s81
      %s84 = sphi 0, %s83
      %s98 = sphi 0, %s84
      %s102 = sphi 0, %s102
      %s104 = sphi 0, %s102
      %s105 = sphi 0, %s104
      %s119 = sphi 0, %s105
      %s123 = sphi 0, %s123
      %s125 = sphi 0, %s123
      %s126 = sphi 0, %s125
      %s140 = sphi 0, %s126
      %s146 = sphi 0, %s148
      %s149 = sphi 0, %s146
      %s150 = sphi 0, %s149
      %s166 = sphi 0, %s150
    $region4: #{tpu_custom_call.1} parent=1 // loop_header_branch
      %17 = sbr.rel (%p15) target = $region8
    $region5: #{tpu_custom_call.1} parent=1 // loop_body
      %s19 = ssub.s32 %s14, 1
      %s20 = ssub.s32 %s14, 2
      %s27 = sadd.s32 1, %s22
      %p28 = scmp.ge.s32.totalorder %s27, 2
      %s29 = scalar_select %p28, 0, %s27
      %s30 = sadd.s32 1, %s21
      %s31 = scalar_select %p28, %s30, %s21
      %p32 = scmp.ge.s32.totalorder %s31, 2
      %s33 = scalar_select %p32, 0, %s31
      %s34 = ssub.s32 %s21, %s33
      %p35 = scmp.eq.s32.totalorder %s34, 0
      %s37 = sadd.s32 %s36, 1
      %s38 = scalar_select %p35, %s36, %s37
      %p41 = pneg %p35
      %p42 = scmp.eq.s32.totalorder %s14, 3
      %p43 = por %p41, %p42
      %p44 = scmp.ne.s32.totalorder %s36, %s39
      %p45 = scmp.eq.s32.totalorder %s14, 0
      %p46 = por %p44, %p45
      %p47 = scmp.ne.s32.totalorder %s36, %s39
      %p48 = scmp.eq.s32.totalorder %s19, 3
      %p49 = por %p47, %p48
      %p50 = scmp.ne.s32.totalorder %s39, %s40
      %p51 = scmp.eq.s32.totalorder %s19, 0
      %p52 = por %p50, %p51
      %p53 = scmp.ne.s32.totalorder %s39, %s40
      %p54 = scmp.eq.s32.totalorder %s20, 3
      %p55 = por %p53, %p54
      %p57 = scmp.ne.s32.totalorder %s40, %s56
      %p58 = scmp.eq.s32.totalorder %s20, 0
      %p59 = por %p57, %p58
      %s61 = sadd.s32 %s60, 1
      %p64 = scmp.eq.s32.totalorder %s14, 3
      %p65 = scmp.ne.s32.totalorder %s60, %s62
      %p66 = scmp.eq.s32.totalorder %s14, 0
      %p67 = por %p65, %p66
      %p68 = scmp.ne.s32.totalorder %s60, %s62
      %p69 = scmp.eq.s32.totalorder %s19, 3
      %p70 = por %p68, %p69
      %p71 = scmp.ne.s32.totalorder %s62, %s63
      %p72 = scmp.eq.s32.totalorder %s19, 0
      %p73 = por %p71, %p72
      %p74 = scmp.ne.s32.totalorder %s62, %s63
      %p75 = scmp.eq.s32.totalorder %s20, 3
      %p76 = por %p74, %p75
      %p78 = scmp.ne.s32.totalorder %s63, %s77
      %p79 = scmp.eq.s32.totalorder %s20, 0
      %p80 = por %p78, %p79
      %s82 = sadd.s32 %s81, 1
      %p85 = scmp.eq.s32.totalorder %s14, 3
      %p86 = scmp.ne.s32.totalorder %s81, %s83
      %p87 = scmp.eq.s32.totalorder %s14, 0
      %p88 = por %p86, %p87
      %p89 = scmp.ne.s32.totalorder %s81, %s83
      %p90 = scmp.eq.s32.totalorder %s19, 3
      %p91 = por %p89, %p90
      %p92 = scmp.ne.s32.totalorder %s83, %s84
      %p93 = scmp.eq.s32.totalorder %s19, 0
      %p94 = por %p92, %p93
      %p95 = scmp.ne.s32.totalorder %s83, %s84
      %p96 = scmp.eq.s32.totalorder %s20, 3
      %p97 = por %p95, %p96
      %p99 = scmp.ne.s32.totalorder %s84, %s98
      %p100 = scmp.eq.s32.totalorder %s20, 0
      %p101 = por %p99, %p100
      %s103 = sadd.s32 %s102, 1
      %p106 = scmp.eq.s32.totalorder %s14, 3
      %p107 = scmp.ne.s32.totalorder %s102, %s104
      %p108 = scmp.eq.s32.totalorder %s14, 0
      %p109 = por %p107, %p108
      %p110 = scmp.ne.s32.totalorder %s102, %s104
      %p111 = scmp.eq.s32.totalorder %s19, 3
      %p112 = por %p110, %p111
      %p113 = scmp.ne.s32.totalorder %s104, %s105
      %p114 = scmp.eq.s32.totalorder %s19, 0
      %p115 = por %p113, %p114
      %p116 = scmp.ne.s32.totalorder %s104, %s105
      %p117 = scmp.eq.s32.totalorder %s20, 3
      %p118 = por %p116, %p117
      %p120 = scmp.ne.s32.totalorder %s105, %s119
      %p121 = scmp.eq.s32.totalorder %s20, 0
      %p122 = por %p120, %p121
      %s124 = sadd.s32 %s123, 1
      %p127 = scmp.eq.s32.totalorder %s14, 3
      %p128 = scmp.ne.s32.totalorder %s123, %s125
      %p129 = scmp.eq.s32.totalorder %s14, 0
      %p130 = por %p128, %p129
      %p131 = scmp.ne.s32.totalorder %s123, %s125
      %p132 = scmp.eq.s32.totalorder %s19, 3
      %p133 = por %p131, %p132
      %p134 = scmp.ne.s32.totalorder %s125, %s126
      %p135 = scmp.eq.s32.totalorder %s19, 0
      %p136 = por %p134, %p135
      %p137 = scmp.ne.s32.totalorder %s125, %s126
      %p138 = scmp.eq.s32.totalorder %s20, 3
      %p139 = por %p137, %p138
      %p141 = scmp.ne.s32.totalorder %s126, %s140
      %p142 = scmp.eq.s32.totalorder %s20, 0
      %p143 = por %p141, %p142
      %s144 = ssub.s32 %s21, %s33
      %p145 = scmp.eq.s32.totalorder %s144, 0
      %s147 = sadd.s32 %s146, 1
      %s148 = scalar_select %p145, %s146, %s147
      %p151 = pneg %p145
      %p152 = scmp.eq.s32.totalorder %s14, 3
      %p153 = por %p151, %p152
      %p154 = scmp.ne.s32.totalorder %s146, %s149
      %p155 = scmp.eq.s32.totalorder %s14, 0
      %p156 = por %p154, %p155
      %p157 = scmp.ne.s32.totalorder %s146, %s149
      %p158 = scmp.eq.s32.totalorder %s19, 3
      %p159 = por %p157, %p158
      %p160 = scmp.ne.s32.totalorder %s149, %s150
      %p161 = scmp.eq.s32.totalorder %s19, 0
      %p162 = por %p160, %p161
      %p163 = scmp.ne.s32.totalorder %s149, %s150
      %p164 = scmp.eq.s32.totalorder %s20, 3
      %p165 = por %p163, %p164
      %p167 = scmp.ne.s32.totalorder %s150, %s166
      %p168 = scmp.eq.s32.totalorder %s20, 0
      %p169 = por %p167, %p168
      %p170 = scmp.le.s32.totalorder 1, %s14
      %p171 = scmp.lt.s32.totalorder %s14, 5
      %p172 = pnand %p170, %p171
      %p173 = pneg %p172
      // Predicated region
      $region9: #{tpu_custom_call.1} parent=5 // pred_check
        _
      $region10: #{tpu_custom_call.1} parent=5 // pred_check_branch
        %175 = sbr.rel (%p172) target = $region12
      $region11: #{tpu_custom_call.1} parent=5 // pred_region
        %s176 = ssub.s32 %s14, 1
        // Predicated region
        $region13: #{tpu_custom_call.1} parent=11 // pred_check
          %p177 = pneg %p73
        $region14: #{tpu_custom_call.1} parent=11 // pred_check_branch
          %179 = sbr.rel (%p177) target = $region16
        $region15: #{tpu_custom_call.1} parent=11 // pred_region
          _
        $region16: #{tpu_custom_call.1} parent=11 // pred_fallthru
          _
        // Predicated region
        $region17: #{tpu_custom_call.1} parent=11 // pred_check
          %p180 = pneg %p94
        $region18: #{tpu_custom_call.1} parent=11 // pred_check_branch
          %182 = sbr.rel (%p180) target = $region20
        $region19: #{tpu_custom_call.1} parent=11 // pred_region
          _
        $region20: #{tpu_custom_call.1} parent=11 // pred_fallthru
          _
        // Predicated region
        $region21: #{tpu_custom_call.1} parent=11 // pred_check
          %p183 = pneg %p115
        $region22: #{tpu_custom_call.1} parent=11 // pred_check_branch
          %185 = sbr.rel (%p183) target = $region24
        $region23: #{tpu_custom_call.1} parent=11 // pred_region
          _
        $region24: #{tpu_custom_call.1} parent=11 // pred_fallthru
          _
        // Predicated region
        $region25: #{tpu_custom_call.1} parent=11 // pred_check
          %p186 = pneg %p136
        $region26: #{tpu_custom_call.1} parent=11 // pred_check_branch
          %188 = sbr.rel (%p186) target = $region28
        $region27: #{tpu_custom_call.1} parent=11 // pred_region
          _
        $region28: #{tpu_custom_call.1} parent=11 // pred_fallthru
          _
      $region12: #{tpu_custom_call.1} parent=5 // pred_fallthru
        _
      %p189 = scmp.lt.s32.totalorder %s14, 4
      // Predicated region
      $region29: #{tpu_custom_call.1} parent=5 // pred_check
        %p190 = pneg %p189
      $region30: #{tpu_custom_call.1} parent=5 // pred_check_branch
        %192 = sbr.rel (%p190) target = $region32
      $region31: #{tpu_custom_call.1} parent=5 // pred_region
        // Predicated region
        $region33: #{tpu_custom_call.1} parent=31 // pred_check
          %p193 = pneg %p46
        $region34: #{tpu_custom_call.1} parent=31 // pred_check_branch
          %195 = sbr.rel (%p193) target = $region36
        $region35: #{tpu_custom_call.1} parent=31 // pred_region
          %p196 = scmp.lt.s32.totalorder %s21, 1
          %s197 = scalar_select %p196, %s21, 1
          %s198 = smul.addr %s197, 54
          %s199 = smul.addr %s198, 4
          %s200 = scalar_lea.vmem %s0, %s199
        $region36: #{tpu_custom_call.1} parent=31 // pred_fallthru
          _
      $region32: #{tpu_custom_call.1} parent=5 // pred_fallthru
        _
      %p201 = scmp.le.s32.totalorder 1, %s14
      %p202 = scmp.lt.s32.totalorder %s14, 5
      %p203 = pnand %p201, %p202
      %p204 = pneg %p203
      // Predicated region
      $region37: #{tpu_custom_call.1} parent=5 // pred_check
        _
      $region38: #{tpu_custom_call.1} parent=5 // pred_check_branch
        %206 = sbr.rel (%p203) target = $region40
      $region39: #{tpu_custom_call.1} parent=5 // pred_region
        %s207 = ssub.s32 %s14, 1
        %p208 = scmp.lt.s32.totalorder %s23, 1
        %s209 = scalar_select %p208, %s23, 1
        %s210 = smul.addr %s209, 54
        %s211 = smul.addr %s210, 4
        %s212 = scalar_lea.vmem %s0, %s211
        %p213 = pneg %p52
        %p214 = pneg %p49
        %p215 = pneg %p73
        %p216 = pneg %p70
        %p217 = pneg %p94
        %p218 = pneg %p91
        %p219 = pneg %p115
        %p220 = pneg %p112
        %p221 = pneg %p136
        %p222 = pneg %p133
        %p223 = pneg %p162
        %p224 = pneg %p159
        %s225 = sand.u32 %s149, 1
        %s226 = scalar_lea.sflag [#allocation4], %s225
        %s227 = sand.u32 %s149, 1
        %s228 = scalar_lea.vmem [#allocation3], %s227
        %p229 = scmp.lt.s32.totalorder %s23, 1
        %s230 = scalar_select %p229, %s23, 1
        %s231 = smul.addr %s230, 54
        %s232 = smul.addr %s231, 4
        %s233 = scalar_lea.vmem %s0, %s232
        %s235 = smul.u32 %s24, 8
        %p236 = scmp.eq.s32.totalorder %s24, 0
        // Predicated region
        $region41: #{tpu_custom_call.1} parent=39 // pred_check
          %p237 = pneg %p236
        $region42: #{tpu_custom_call.1} parent=39 // pred_check_branch
          %239 = sbr.rel (%p237) target = $region44
        $region43: #{tpu_custom_call.1} parent=39 // pred_region
          %240 = vst [vmem:[#allocation2] sm:$0x1] 0.0
        $region44: #{tpu_custom_call.1} parent=39 // pred_fallthru
          _
        %s241 = smul.u32 %s235, 3
        %s242 = smul.addr %s241, 4
        %s243 = scalar_lea.vmem %s233, %s242
        %v244 = vld [vmem:[%s243] sm:$0xf]
        %v245 = vld [vmem:[%s243 + $0x4] sm:$0xf]
        %v246 = vld [vmem:[%s243 + $0xc] sm:$0xf]
        %v247 = vld [vmem:[%s243 + $0x10] sm:$0xf]
        %v248 = vld [vmem:[%s243 + $0x18] sm:$0xf]
        %v249 = vld [vmem:[%s243 + $0x1c] sm:$0xf]
        %v250 = vld [vmem:[%s243 + $0x24] sm:$0xf]
        %v251 = vld [vmem:[%s243 + $0x28] sm:$0xf]
        %v252 = vld [vmem:[%s243 + $0x30] sm:$0xf]
        %v253 = vld [vmem:[%s243 + $0x34] sm:$0xf]
        %v254 = vld [vmem:[%s243 + $0x3c] sm:$0xf]
        %v255 = vld [vmem:[%s243 + $0x40] sm:$0xf]
        %v256 = vld [vmem:[%s243 + $0x48] sm:$0xf]
        %v257 = vld [vmem:[%s243 + $0x4c] sm:$0xf]
        %v258 = vld [vmem:[%s243 + $0x54] sm:$0xf]
        %v259 = vld [vmem:[%s243 + $0x58] sm:$0xf]
        %v260 = vld [vmem:[%s1] sm:$0x3]
        %v261 = vld [vmem:[%s243 + $0x8] sm:$0x1]
        %v262 = vld [vmem:[%s243 + $0x14] sm:$0x1]
        %v263 = vld [vmem:[%s243 + $0x20] sm:$0x1]
        %v264 = vld [vmem:[%s243 + $0x2c] sm:$0x1]
        %v265 = vld [vmem:[%s243 + $0x38] sm:$0x1]
        %v266 = vld [vmem:[%s243 + $0x44] sm:$0x1]
        %v267 = vld [vmem:[%s243 + $0x50] sm:$0x1]
        %v268 = vld [vmem:[%s243 + $0x5c] sm:$0x1]
        %vm269 = vsmask.f32 3328
        %vm270 = vsmask.f32 7440
        %vm271 = vmor %vm269, %vm270
        %v273 = vshrl.u32 %v244, 16
        %v275 = vrot.slane %v273, 4
        %v276 = vshll.u32 %v244, 16
        %v278 = vrot.slane %v276, 5
        %v279 = vor.u32 %v275, %v278
        %v280 = vrot.slane %v279, 4
        %v282 = vshll.u32 %v245, 16
        %v284 = vrot.slane %v282, 5
        %v285 = vsel %vm271, %v280, %v284
        %v286 = vshrl.u32 %v245, 16
        %v288 = vrot.slane %v286, 4
        %v289 = vor.u32 %v288, %v284
        %v290 = vrot.slane %v289, 4
        %v292 = vshll.u32 %v261, 16
        %v294 = vrot.slane %v292, 5
        %v295 = vsel %vm271, %v290, %v294
        %v297 = vshrl.u32 %v246, 16
        %v299 = vrot.slane %v297, 4
        %v300 = vshll.u32 %v246, 16
        %v302 = vrot.slane %v300, 5
        %v303 = vor.u32 %v299, %v302
        %v304 = vrot.slane %v303, 4
        %v306 = vshll.u32 %v247, 16
        %v308 = vrot.slane %v306, 5
        %v309 = vsel %vm271, %v304, %v308
        %v310 = vshrl.u32 %v247, 16
        %v312 = vrot.slane %v310, 4
        %v313 = vor.u32 %v312, %v308
        %v314 = vrot.slane %v313, 4
        %v316 = vshll.u32 %v262, 16
        %v318 = vrot.slane %v316, 5
        %v319 = vsel %vm271, %v314, %v318
        %v321 = vshrl.u32 %v248, 16
        %v323 = vrot.slane %v321, 4
        %v324 = vshll.u32 %v248, 16
        %v326 = vrot.slane %v324, 5
        %v327 = vor.u32 %v323, %v326
        %v328 = vrot.slane %v327, 4
        %v330 = vshll.u32 %v249, 16
        %v332 = vrot.slane %v330, 5
        %v333 = vsel %vm271, %v328, %v332
        %v334 = vshrl.u32 %v249, 16
        %v336 = vrot.slane %v334, 4
        %v337 = vor.u32 %v336, %v332
        %v338 = vrot.slane %v337, 4
        %v340 = vshll.u32 %v263, 16
        %v342 = vrot.slane %v340, 5
        %v343 = vsel %vm271, %v338, %v342
        %v345 = vshrl.u32 %v250, 16
        %v347 = vrot.slane %v345, 4
        %v348 = vshll.u32 %v250, 16
        %v350 = vrot.slane %v348, 5
        %v351 = vor.u32 %v347, %v350
        %v352 = vrot.slane %v351, 4
        %v354 = vshll.u32 %v251, 16
        %v356 = vrot.slane %v354, 5
        %v357 = vsel %vm271, %v352, %v356
        %v358 = vshrl.u32 %v251, 16
        %v360 = vrot.slane %v358, 4
        %v361 = vor.u32 %v360, %v356
        %v362 = vrot.slane %v361, 4
        %v364 = vshll.u32 %v264, 16
        %v366 = vrot.slane %v364, 5
        %v367 = vsel %vm271, %v362, %v366
        %v369 = vshrl.u32 %v252, 16
        %v371 = vrot.slane %v369, 4
        %v372 = vshll.u32 %v252, 16
        %v374 = vrot.slane %v372, 5
        %v375 = vor.u32 %v371, %v374
        %v376 = vrot.slane %v375, 4
        %v378 = vshll.u32 %v253, 16
        %v380 = vrot.slane %v378, 5
        %v381 = vsel %vm271, %v376, %v380
        %v382 = vshrl.u32 %v253, 16
        %v384 = vrot.slane %v382, 4
        %v385 = vor.u32 %v384, %v380
        %v386 = vrot.slane %v385, 4
        %v388 = vshll.u32 %v265, 16
        %v390 = vrot.slane %v388, 5
        %v391 = vsel %vm271, %v386, %v390
        %v393 = vshrl.u32 %v254, 16
        %v395 = vrot.slane %v393, 4
        %v396 = vshll.u32 %v254, 16
        %v398 = vrot.slane %v396, 5
        %v399 = vor.u32 %v395, %v398
        %v400 = vrot.slane %v399, 4
        %v402 = vshll.u32 %v255, 16
        %v404 = vrot.slane %v402, 5
        %v405 = vsel %vm271, %v400, %v404
        %v406 = vshrl.u32 %v255, 16
        %v408 = vrot.slane %v406, 4
        %v409 = vor.u32 %v408, %v404
        %v410 = vrot.slane %v409, 4
        %v412 = vshll.u32 %v266, 16
        %v414 = vrot.slane %v412, 5
        %v415 = vsel %vm271, %v410, %v414
        %v417 = vshrl.u32 %v256, 16
        %v419 = vrot.slane %v417, 4
        %v420 = vshll.u32 %v256, 16
        %v422 = vrot.slane %v420, 5
        %v423 = vor.u32 %v419, %v422
        %v424 = vrot.slane %v423, 4
        %v426 = vshll.u32 %v257, 16
        %v428 = vrot.slane %v426, 5
        %v429 = vsel %vm271, %v424, %v428
        %v430 = vshrl.u32 %v257, 16
        %v432 = vrot.slane %v430, 4
        %v433 = vor.u32 %v432, %v428
        %v434 = vrot.slane %v433, 4
        %v436 = vshll.u32 %v267, 16
        %v438 = vrot.slane %v436, 5
        %v439 = vsel %vm271, %v434, %v438
        %v441 = vshrl.u32 %v258, 16
        %v443 = vrot.slane %v441, 4
        %v444 = vshll.u32 %v258, 16
        %v446 = vrot.slane %v444, 5
        %v447 = vor.u32 %v443, %v446
        %v448 = vrot.slane %v447, 4
        %v450 = vshll.u32 %v259, 16
        %v452 = vrot.slane %v450, 5
        %v453 = vsel %vm271, %v448, %v452
        %v454 = vshrl.u32 %v259, 16
        %v456 = vrot.slane %v454, 4
        %v457 = vor.u32 %v456, %v452
        %v458 = vrot.slane %v457, 4
        %v460 = vshll.u32 %v268, 16
        %v462 = vrot.slane %v460, 5
        %v463 = vsel %vm271, %v458, %v462
        %s464 = scalar_lea.vmem %s1, 2
        %v465 = vld [vmem:[%s464] sm:$0x3]
        %v466 = vunpack.c.l.b16 %v285
        %v467 = vunpack.c.l.b16 %v295
        %v468 = vunpack.c.l.b16 %v309
        %v469 = vunpack.c.l.b16 %v319
        %v470 = vunpack.c.l.b16 %v333
        %v471 = vunpack.c.l.b16 %v343
        %v472 = vunpack.c.l.b16 %v357
        %v473 = vunpack.c.l.b16 %v367
        %v474 = vunpack.c.l.b16 %v381
        %v475 = vunpack.c.l.b16 %v391
        %v476 = vunpack.c.l.b16 %v405
        %v477 = vunpack.c.l.b16 %v415
        %v478 = vunpack.c.l.b16 %v429
        %v479 = vunpack.c.l.b16 %v439
        %v480 = vunpack.c.l.b16 %v453
        %v481 = vunpack.c.l.b16 %v463
        %v482 = vpack.c.b16 %v467, %v466
        %v483 = vpack.c.b16 %v469, %v468
        %v484 = vpack.c.b16 %v471, %v470
        %v485 = vpack.c.b16 %v473, %v472
        %v486 = vpack.c.b16 %v475, %v474
        %v487 = vpack.c.b16 %v477, %v476
        %v488 = vpack.c.b16 %v479, %v478
        %v489 = vpack.c.b16 %v481, %v480
        %vm490 = vcmask 31744
        %v492 = vsel %vm490, %v482, 0
        %v495 = vsel %vm490, %v483, 0
        %v498 = vsel %vm490, %v484, 0
        %v501 = vsel %vm490, %v485, 0
        %v504 = vsel %vm490, %v486, 0
        %v507 = vsel %vm490, %v487, 0
        %v510 = vsel %vm490, %v488, 0
        %v513 = vsel %vm490, %v489, 0
        %vm515 = vcmask 1041408
        %v517 = vsel %vm515, %v465, 0
        %519 = vmatpush.bf16.msra.mxu0 0
        %520 = vmatpush.bf16.msra.mxu0 0
        %521 = vmatpush.bf16.msra.mxu0 0
        %522 = vmatpush.bf16.msra.mxu0 0
        %523 = vmatpush.bf16.msra.mxu0 0
        %524 = vmatpush.bf16.msra.mxu0 0
        %525 = vmatpush.bf16.msra.mxu0 0
        %526 = vmatpush.bf16.msra.mxu0 %v517
        %527 = vmatmul.bf16.gmra.mxu0 %v492
        %v528 = vpop.f32.mrf.mxu0
        %v529 = vadd.f32 0.0, %v528
        %v530 = vpop.f32.mrf.mxu0
        %v531 = vadd.f32 0.0, %v530
        %532 = vmatmul.bf16.gmra.mxu0 %v495
        %v533 = vpop.f32.mrf.mxu0
        %v534 = vadd.f32 0.0, %v533
        %v535 = vpop.f32.mrf.mxu0
        %v536 = vadd.f32 0.0, %v535
        %537 = vmatmul.bf16.gmra.mxu0 %v498
        %v538 = vpop.f32.mrf.mxu0
        %v539 = vadd.f32 0.0, %v538
        %v540 = vpop.f32.mrf.mxu0
        %v541 = vadd.f32 0.0, %v540
        %542 = vmatmul.bf16.gmra.mxu0 %v501
        %v543 = vpop.f32.mrf.mxu0
        %v544 = vadd.f32 0.0, %v543
        %v545 = vpop.f32.mrf.mxu0
        %v546 = vadd.f32 0.0, %v545
        %547 = vmatmul.bf16.gmra.mxu0 %v504
        %v548 = vpop.f32.mrf.mxu0
        %v549 = vadd.f32 0.0, %v548
        %v550 = vpop.f32.mrf.mxu0
        %v551 = vadd.f32 0.0, %v550
        %552 = vmatmul.bf16.gmra.mxu0 %v507
        %v553 = vpop.f32.mrf.mxu0
        %v554 = vadd.f32 0.0, %v553
        %v555 = vpop.f32.mrf.mxu0
        %v556 = vadd.f32 0.0, %v555
        %557 = vmatmul.bf16.gmra.mxu0 %v510
        %v558 = vpop.f32.mrf.mxu0
        %v559 = vadd.f32 0.0, %v558
        %v560 = vpop.f32.mrf.mxu0
        %v561 = vadd.f32 0.0, %v560
        %562 = vmatmul.bf16.gmra.mxu0 %v513
        %v563 = vpop.f32.mrf.mxu0
        %v564 = vadd.f32 0.0, %v563
        %v565 = vpop.f32.mrf.mxu0
        %v566 = vadd.f32 0.0, %v565
        %567 = vdwg.mxu0
        %v584 = vunpack.c.l.b16 %v244
        %v585 = vunpack.c.l.b16 %v245
        %v586 = vunpack.c.l.b16 %v246
        %v587 = vunpack.c.l.b16 %v247
        %v588 = vunpack.c.l.b16 %v248
        %v589 = vunpack.c.l.b16 %v249
        %v590 = vunpack.c.l.b16 %v250
        %v591 = vunpack.c.l.b16 %v251
        %v592 = vunpack.c.l.b16 %v252
        %v593 = vunpack.c.l.b16 %v253
        %v594 = vunpack.c.l.b16 %v254
        %v595 = vunpack.c.l.b16 %v255
        %v596 = vunpack.c.l.b16 %v256
        %v597 = vunpack.c.l.b16 %v257
        %v598 = vunpack.c.l.b16 %v258
        %v599 = vunpack.c.l.b16 %v259
        %v600 = vpack.c.b16 %v585, %v584
        %v601 = vpack.c.b16 %v587, %v586
        %v602 = vpack.c.b16 %v589, %v588
        %v603 = vpack.c.b16 %v591, %v590
        %v604 = vpack.c.b16 %v593, %v592
        %v605 = vpack.c.b16 %v595, %v594
        %v606 = vpack.c.b16 %v597, %v596
        %v607 = vpack.c.b16 %v599, %v598
        %v609 = vsel %vm490, %v600, 0
        %v612 = vsel %vm490, %v601, 0
        %v615 = vsel %vm490, %v602, 0
        %v618 = vsel %vm490, %v603, 0
        %v621 = vsel %vm490, %v604, 0
        %v624 = vsel %vm490, %v605, 0
        %v627 = vsel %vm490, %v606, 0
        %v630 = vsel %vm490, %v607, 0
        %v633 = vsel %vm515, %v260, 0
        %635 = vmatpush.bf16.msra.mxu0 0
        %636 = vmatpush.bf16.msra.mxu0 0
        %637 = vmatpush.bf16.msra.mxu0 0
        %638 = vmatpush.bf16.msra.mxu0 0
        %639 = vmatpush.bf16.msra.mxu0 0
        %640 = vmatpush.bf16.msra.mxu0 0
        %641 = vmatpush.bf16.msra.mxu0 0
        %642 = vmatpush.bf16.msra.mxu0 %v633
        %643 = vmatmul.bf16.gmra.mxu0 %v609
        %v644 = vpop.f32.mrf.mxu0
        %v645 = vadd.f32 %v529, %v644
        %v646 = vpop.f32.mrf.mxu0
        %v647 = vadd.f32 %v531, %v646
        %648 = vmatmul.bf16.gmra.mxu0 %v612
        %v649 = vpop.f32.mrf.mxu0
        %v650 = vadd.f32 %v534, %v649
        %v651 = vpop.f32.mrf.mxu0
        %v652 = vadd.f32 %v536, %v651
        %653 = vmatmul.bf16.gmra.mxu0 %v615
        %v654 = vpop.f32.mrf.mxu0
        %v655 = vadd.f32 %v539, %v654
        %v656 = vpop.f32.mrf.mxu0
        %v657 = vadd.f32 %v541, %v656
        %658 = vmatmul.bf16.gmra.mxu0 %v618
        %v659 = vpop.f32.mrf.mxu0
        %v660 = vadd.f32 %v544, %v659
        %v661 = vpop.f32.mrf.mxu0
        %v662 = vadd.f32 %v546, %v661
        %663 = vmatmul.bf16.gmra.mxu0 %v621
        %v664 = vpop.f32.mrf.mxu0
        %v665 = vadd.f32 %v549, %v664
        %v666 = vpop.f32.mrf.mxu0
        %v667 = vadd.f32 %v551, %v666
        %668 = vmatmul.bf16.gmra.mxu0 %v624
        %v669 = vpop.f32.mrf.mxu0
        %v670 = vadd.f32 %v554, %v669
        %v671 = vpop.f32.mrf.mxu0
        %v672 = vadd.f32 %v556, %v671
        %673 = vmatmul.bf16.gmra.mxu0 %v627
        %v674 = vpop.f32.mrf.mxu0
        %v675 = vadd.f32 %v559, %v674
        %v676 = vpop.f32.mrf.mxu0
        %v677 = vadd.f32 %v561, %v676
        %678 = vmatmul.bf16.gmra.mxu0 %v630
        %v679 = vpop.f32.mrf.mxu0
        %v680 = vadd.f32 %v564, %v679
        %v681 = vpop.f32.mrf.mxu0
        %v682 = vadd.f32 %v566, %v681
        %683 = vdwg.mxu0
        %v684 = vld [vmem:[%s243] sm:$0xe]
        %v685 = vld [vmem:[%s243 + $0xc] sm:$0xe]
        %v686 = vld [vmem:[%s243 + $0x18] sm:$0xe]
        %v687 = vld [vmem:[%s243 + $0x24] sm:$0xe]
        %v688 = vld [vmem:[%s243 + $0x30] sm:$0xe]
        %v689 = vld [vmem:[%s243 + $0x3c] sm:$0xe]
        %v690 = vld [vmem:[%s243 + $0x48] sm:$0xe]
        %v691 = vld [vmem:[%s243 + $0x54] sm:$0xe]
        %vm708 = vcmask 1042432
        %vm709 = vcmask 1046532
        %vm710 = vmor %vm708, %vm709
        %v711 = vrot.slane %v684, 5
        %v712 = vrot.slane %v711, 4
        %v713 = vrot.slane %v245, 5
        %v714 = vsel %vm710, %v712, %v713
        %v715 = vrot.slane %v713, 4
        %v716 = vrot.slane %v261, 5
        %v717 = vsel %vm710, %v715, %v716
        %v718 = vrot.slane %v685, 5
        %v719 = vrot.slane %v718, 4
        %v720 = vrot.slane %v247, 5
        %v721 = vsel %vm710, %v719, %v720
        %v722 = vrot.slane %v720, 4
        %v723 = vrot.slane %v262, 5
        %v724 = vsel %vm710, %v722, %v723
        %v725 = vrot.slane %v686, 5
        %v726 = vrot.slane %v725, 4
        %v727 = vrot.slane %v249, 5
        %v728 = vsel %vm710, %v726, %v727
        %v729 = vrot.slane %v727, 4
        %v730 = vrot.slane %v263, 5
        %v731 = vsel %vm710, %v729, %v730
        %v732 = vrot.slane %v687, 5
        %v733 = vrot.slane %v732, 4
        %v734 = vrot.slane %v251, 5
        %v735 = vsel %vm710, %v733, %v734
        %v736 = vrot.slane %v734, 4
        %v737 = vrot.slane %v264, 5
        %v738 = vsel %vm710, %v736, %v737
        %v739 = vrot.slane %v688, 5
        %v740 = vrot.slane %v739, 4
        %v741 = vrot.slane %v253, 5
        %v742 = vsel %vm710, %v740, %v741
        %v743 = vrot.slane %v741, 4
        %v744 = vrot.slane %v265, 5
        %v745 = vsel %vm710, %v743, %v744
        %v746 = vrot.slane %v689, 5
        %v747 = vrot.slane %v746, 4
        %v748 = vrot.slane %v255, 5
        %v749 = vsel %vm710, %v747, %v748
        %v750 = vrot.slane %v748, 4
        %v751 = vrot.slane %v266, 5
        %v752 = vsel %vm710, %v750, %v751
        %v753 = vrot.slane %v690, 5
        %v754 = vrot.slane %v753, 4
        %v755 = vrot.slane %v257, 5
        %v756 = vsel %vm710, %v754, %v755
        %v757 = vrot.slane %v755, 4
        %v758 = vrot.slane %v267, 5
        %v759 = vsel %vm710, %v757, %v758
        %v760 = vrot.slane %v691, 5
        %v761 = vrot.slane %v760, 4
        %v762 = vrot.slane %v259, 5
        %v763 = vsel %vm710, %v761, %v762
        %v764 = vrot.slane %v762, 4
        %v765 = vrot.slane %v268, 5
        %v766 = vsel %vm710, %v764, %v765
        %s767 = scalar_lea.vmem %s1, 4
        %v768 = vld [vmem:[%s767] sm:$0x3]
        %v769 = vunpack.c.l.b16 %v714
        %v770 = vunpack.c.l.b16 %v717
        %v771 = vunpack.c.l.b16 %v721
        %v772 = vunpack.c.l.b16 %v724
        %v773 = vunpack.c.l.b16 %v728
        %v774 = vunpack.c.l.b16 %v731
        %v775 = vunpack.c.l.b16 %v735
        %v776 = vunpack.c.l.b16 %v738
        %v777 = vunpack.c.l.b16 %v742
        %v778 = vunpack.c.l.b16 %v745
        %v779 = vunpack.c.l.b16 %v749
        %v780 = vunpack.c.l.b16 %v752
        %v781 = vunpack.c.l.b16 %v756
        %v782 = vunpack.c.l.b16 %v759
        %v783 = vunpack.c.l.b16 %v763
        %v784 = vunpack.c.l.b16 %v766
        %v785 = vpack.c.b16 %v770, %v769
        %v786 = vpack.c.b16 %v772, %v771
        %v787 = vpack.c.b16 %v774, %v773
        %v788 = vpack.c.b16 %v776, %v775
        %v789 = vpack.c.b16 %v778, %v777
        %v790 = vpack.c.b16 %v780, %v779
        %v791 = vpack.c.b16 %v782, %v781
        %v792 = vpack.c.b16 %v784, %v783
        %v794 = vsel %vm490, %v785, 0
        %v797 = vsel %vm490, %v786, 0
        %v800 = vsel %vm490, %v787, 0
        %v803 = vsel %vm490, %v788, 0
        %v806 = vsel %vm490, %v789, 0
        %v809 = vsel %vm490, %v790, 0
        %v812 = vsel %vm490, %v791, 0
        %v815 = vsel %vm490, %v792, 0
        %v818 = vsel %vm515, %v768, 0
        %820 = vmatpush.bf16.msra.mxu0 0
        %821 = vmatpush.bf16.msra.mxu0 0
        %822 = vmatpush.bf16.msra.mxu0 0
        %823 = vmatpush.bf16.msra.mxu0 0
        %824 = vmatpush.bf16.msra.mxu0 0
        %825 = vmatpush.bf16.msra.mxu0 0
        %826 = vmatpush.bf16.msra.mxu0 0
        %827 = vmatpush.bf16.msra.mxu0 %v818
        %828 = vmatmul.bf16.gmra.mxu0 %v794
        %v829 = vpop.f32.mrf.mxu0
        %v830 = vadd.f32 0.0, %v829
        %v831 = vpop.f32.mrf.mxu0
        %v832 = vadd.f32 0.0, %v831
        %833 = vmatmul.bf16.gmra.mxu0 %v797
        %v834 = vpop.f32.mrf.mxu0
        %v835 = vadd.f32 0.0, %v834
        %v836 = vpop.f32.mrf.mxu0
        %v837 = vadd.f32 0.0, %v836
        %838 = vmatmul.bf16.gmra.mxu0 %v800
        %v839 = vpop.f32.mrf.mxu0
        %v840 = vadd.f32 0.0, %v839
        %v841 = vpop.f32.mrf.mxu0
        %v842 = vadd.f32 0.0, %v841
        %843 = vmatmul.bf16.gmra.mxu0 %v803
        %v844 = vpop.f32.mrf.mxu0
        %v845 = vadd.f32 0.0, %v844
        %v846 = vpop.f32.mrf.mxu0
        %v847 = vadd.f32 0.0, %v846
        %848 = vmatmul.bf16.gmra.mxu0 %v806
        %v849 = vpop.f32.mrf.mxu0
        %v850 = vadd.f32 0.0, %v849
        %v851 = vpop.f32.mrf.mxu0
        %v852 = vadd.f32 0.0, %v851
        %853 = vmatmul.bf16.gmra.mxu0 %v809
        %v854 = vpop.f32.mrf.mxu0
        %v855 = vadd.f32 0.0, %v854
        %v856 = vpop.f32.mrf.mxu0
        %v857 = vadd.f32 0.0, %v856
        %858 = vmatmul.bf16.gmra.mxu0 %v812
        %v859 = vpop.f32.mrf.mxu0
        %v860 = vadd.f32 0.0, %v859
        %v861 = vpop.f32.mrf.mxu0
        %v862 = vadd.f32 0.0, %v861
        %863 = vmatmul.bf16.gmra.mxu0 %v815
        %v864 = vpop.f32.mrf.mxu0
        %v865 = vadd.f32 0.0, %v864
        %v866 = vpop.f32.mrf.mxu0
        %v867 = vadd.f32 0.0, %v866
        %868 = vdwg.mxu0
        %v869 = vadd.f32 %v645, %v830
        %v870 = vadd.f32 %v647, %v832
        %v871 = vadd.f32 %v650, %v835
        %v872 = vadd.f32 %v652, %v837
        %v873 = vadd.f32 %v655, %v840
        %v874 = vadd.f32 %v657, %v842
        %v875 = vadd.f32 %v660, %v845
        %v876 = vadd.f32 %v662, %v847
        %v877 = vadd.f32 %v665, %v850
        %v878 = vadd.f32 %v667, %v852
        %v879 = vadd.f32 %v670, %v855
        %v880 = vadd.f32 %v672, %v857
        %v881 = vadd.f32 %v675, %v860
        %v882 = vadd.f32 %v677, %v862
        %v883 = vadd.f32 %v680, %v865
        %v884 = vadd.f32 %v682, %v867
        %s885 = sadd.s32 %s235, 1
        %s886 = smul.u32 %s885, 3
        %s887 = smul.addr %s886, 4
        %s888 = scalar_lea.vmem %s233, %s887
        %v889 = vld [vmem:[%s888] sm:$0xf]
        %v890 = vld [vmem:[%s888 + $0x4] sm:$0xf]
        %v891 = vld [vmem:[%s888 + $0xc] sm:$0xf]
        %v892 = vld [vmem:[%s888 + $0x10] sm:$0xf]
        %v893 = vld [vmem:[%s888 + $0x18] sm:$0xf]
        %v894 = vld [vmem:[%s888 + $0x1c] sm:$0xf]
        %v895 = vld [vmem:[%s888 + $0x24] sm:$0xf]
        %v896 = vld [vmem:[%s888 + $0x28] sm:$0xf]
        %v897 = vld [vmem:[%s888 + $0x30] sm:$0xf]
        %v898 = vld [vmem:[%s888 + $0x34] sm:$0xf]
        %v899 = vld [vmem:[%s888 + $0x3c] sm:$0xf]
        %v900 = vld [vmem:[%s888 + $0x40] sm:$0xf]
        %v901 = vld [vmem:[%s888 + $0x48] sm:$0xf]
        %v902 = vld [vmem:[%s888 + $0x4c] sm:$0xf]
        %v903 = vld [vmem:[%s888 + $0x54] sm:$0xf]
        %v904 = vld [vmem:[%s888 + $0x58] sm:$0xf]
        %s905 = scalar_lea.vmem %s1, 6
        %v906 = vld [vmem:[%s905] sm:$0x3]
        %v923 = vunpack.c.l.b16 %v889
        %v924 = vunpack.c.l.b16 %v890
        %v925 = vunpack.c.l.b16 %v891
        %v926 = vunpack.c.l.b16 %v892
        %v927 = vunpack.c.l.b16 %v893
        %v928 = vunpack.c.l.b16 %v894
        %v929 = vunpack.c.l.b16 %v895
        %v930 = vunpack.c.l.b16 %v896
        %v931 = vunpack.c.l.b16 %v897
        %v932 = vunpack.c.l.b16 %v898
        %v933 = vunpack.c.l.b16 %v899
        %v934 = vunpack.c.l.b16 %v900
        %v935 = vunpack.c.l.b16 %v901
        %v936 = vunpack.c.l.b16 %v902
        %v937 = vunpack.c.l.b16 %v903
        %v938 = vunpack.c.l.b16 %v904
        %v939 = vpack.c.b16 %v924, %v923
        %v940 = vpack.c.b16 %v926, %v925
        %v941 = vpack.c.b16 %v928, %v927
        %v942 = vpack.c.b16 %v930, %v929
        %v943 = vpack.c.b16 %v932, %v931
        %v944 = vpack.c.b16 %v934, %v933
        %v945 = vpack.c.b16 %v936, %v935
        %v946 = vpack.c.b16 %v938, %v937
        %v948 = vsel %vm490, %v939, 0
        %v951 = vsel %vm490, %v940, 0
        %v954 = vsel %vm490, %v941, 0
        %v957 = vsel %vm490, %v942, 0
        %v960 = vsel %vm490, %v943, 0
        %v963 = vsel %vm490, %v944, 0
        %v966 = vsel %vm490, %v945, 0
        %v969 = vsel %vm490, %v946, 0
        %v972 = vsel %vm515, %v906, 0
        %974 = vmatpush.bf16.msra.mxu0 0
        %975 = vmatpush.bf16.msra.mxu0 0
        %976 = vmatpush.bf16.msra.mxu0 0
        %977 = vmatpush.bf16.msra.mxu0 0
        %978 = vmatpush.bf16.msra.mxu0 0
        %979 = vmatpush.bf16.msra.mxu0 0
        %980 = vmatpush.bf16.msra.mxu0 0
        %981 = vmatpush.bf16.msra.mxu0 %v972
        %982 = vmatmul.bf16.gmra.mxu0 %v948
        %v983 = vpop.f32.mrf.mxu0
        %v984 = vadd.f32 0.0, %v983
        %v985 = vpop.f32.mrf.mxu0
        %v986 = vadd.f32 0.0, %v985
        %987 = vmatmul.bf16.gmra.mxu0 %v951
        %v988 = vpop.f32.mrf.mxu0
        %v989 = vadd.f32 0.0, %v988
        %v990 = vpop.f32.mrf.mxu0
        %v991 = vadd.f32 0.0, %v990
        %992 = vmatmul.bf16.gmra.mxu0 %v954
        %v993 = vpop.f32.mrf.mxu0
        %v994 = vadd.f32 0.0, %v993
        %v995 = vpop.f32.mrf.mxu0
        %v996 = vadd.f32 0.0, %v995
        %997 = vmatmul.bf16.gmra.mxu0 %v957
        %v998 = vpop.f32.mrf.mxu0
        %v999 = vadd.f32 0.0, %v998
        %v1000 = vpop.f32.mrf.mxu0
        %v1001 = vadd.f32 0.0, %v1000
        %1002 = vmatmul.bf16.gmra.mxu0 %v960
        %v1003 = vpop.f32.mrf.mxu0
        %v1004 = vadd.f32 0.0, %v1003
        %v1005 = vpop.f32.mrf.mxu0
        %v1006 = vadd.f32 0.0, %v1005
        %1007 = vmatmul.bf16.gmra.mxu0 %v963
        %v1008 = vpop.f32.mrf.mxu0
        %v1009 = vadd.f32 0.0, %v1008
        %v1010 = vpop.f32.mrf.mxu0
        %v1011 = vadd.f32 0.0, %v1010
        %1012 = vmatmul.bf16.gmra.mxu0 %v966
        %v1013 = vpop.f32.mrf.mxu0
        %v1014 = vadd.f32 0.0, %v1013
        %v1015 = vpop.f32.mrf.mxu0
        %v1016 = vadd.f32 0.0, %v1015
        %1017 = vmatmul.bf16.gmra.mxu0 %v969
        %v1018 = vpop.f32.mrf.mxu0
        %v1019 = vadd.f32 0.0, %v1018
        %v1020 = vpop.f32.mrf.mxu0
        %v1021 = vadd.f32 0.0, %v1020
        %1022 = vdwg.mxu0
        %v1023 = vadd.f32 %v869, %v984
        %v1024 = vadd.f32 %v870, %v986
        %v1025 = vadd.f32 %v871, %v989
        %v1026 = vadd.f32 %v872, %v991
        %v1027 = vadd.f32 %v873, %v994
        %v1028 = vadd.f32 %v874, %v996
        %v1029 = vadd.f32 %v875, %v999
        %v1030 = vadd.f32 %v876, %v1001
        %v1031 = vadd.f32 %v877, %v1004
        %v1032 = vadd.f32 %v878, %v1006
        %v1033 = vadd.f32 %v879, %v1009
        %v1034 = vadd.f32 %v880, %v1011
        %v1035 = vadd.f32 %v881, %v1014
        %v1036 = vadd.f32 %v882, %v1016
        %v1037 = vadd.f32 %v883, %v1019
        %v1038 = vadd.f32 %v884, %v1021
        %v1039 = vld [vmem:[%s888] sm:$0xf]
        %v1040 = vld [vmem:[%s888 + $0x4] sm:$0xf]
        %v1041 = vld [vmem:[%s888 + $0x8] sm:$0x1]
        %v1042 = vld [vmem:[%s888 + $0xc] sm:$0xf]
        %v1043 = vld [vmem:[%s888 + $0x10] sm:$0xf]
        %v1044 = vld [vmem:[%s888 + $0x14] sm:$0x1]
        %v1045 = vld [vmem:[%s888 + $0x18] sm:$0xf]
        %v1046 = vld [vmem:[%s888 + $0x1c] sm:$0xf]
        %v1047 = vld [vmem:[%s888 + $0x20] sm:$0x1]
        %v1048 = vld [vmem:[%s888 + $0x24] sm:$0xf]
        %v1049 = vld [vmem:[%s888 + $0x28] sm:$0xf]
        %v1050 = vld [vmem:[%s888 + $0x2c] sm:$0x1]
        %v1051 = vld [vmem:[%s888 + $0x30] sm:$0xf]
        %v1052 = vld [vmem:[%s888 + $0x34] sm:$0xf]
        %v1053 = vld [vmem:[%s888 + $0x38] sm:$0x1]
        %v1054 = vld [vmem:[%s888 + $0x3c] sm:$0xf]
        %v1055 = vld [vmem:[%s888 + $0x40] sm:$0xf]
        %v1056 = vld [vmem:[%s888 + $0x44] sm:$0x1]
        %v1057 = vld [vmem:[%s888 + $0x48] sm:$0xf]
        %v1058 = vld [vmem:[%s888 + $0x4c] sm:$0xf]
        %v1059 = vld [vmem:[%s888 + $0x50] sm:$0x1]
        %v1060 = vld [vmem:[%s888 + $0x54] sm:$0xf]
        %v1061 = vld [vmem:[%s888 + $0x58] sm:$0xf]
        %v1062 = vld [vmem:[%s888 + $0x5c] sm:$0x1]
        %v1064 = vshrl.u32 %v1039, 16
        %v1066 = vrot.slane %v1064, 4
        %v1067 = vshll.u32 %v1039, 16
        %v1069 = vrot.slane %v1067, 5
        %v1070 = vor.u32 %v1066, %v1069
        %v1071 = vrot.slane %v1070, 4
        %v1073 = vshll.u32 %v1040, 16
        %v1075 = vrot.slane %v1073, 5
        %v1076 = vsel %vm271, %v1071, %v1075
        %v1077 = vshrl.u32 %v1040, 16
        %v1079 = vrot.slane %v1077, 4
        %v1080 = vor.u32 %v1079, %v1075
        %v1081 = vrot.slane %v1080, 4
        %v1083 = vshll.u32 %v1041, 16
        %v1085 = vrot.slane %v1083, 5
        %v1086 = vsel %vm271, %v1081, %v1085
        %v1088 = vshrl.u32 %v1042, 16
        %v1090 = vrot.slane %v1088, 4
        %v1091 = vshll.u32 %v1042, 16
        %v1093 = vrot.slane %v1091, 5
        %v1094 = vor.u32 %v1090, %v1093
        %v1095 = vrot.slane %v1094, 4
        %v1097 = vshll.u32 %v1043, 16
        %v1099 = vrot.slane %v1097, 5
        %v1100 = vsel %vm271, %v1095, %v1099
        %v1101 = vshrl.u32 %v1043, 16
        %v1103 = vrot.slane %v1101, 4
        %v1104 = vor.u32 %v1103, %v1099
        %v1105 = vrot.slane %v1104, 4
        %v1107 = vshll.u32 %v1044, 16
        %v1109 = vrot.slane %v1107, 5
        %v1110 = vsel %vm271, %v1105, %v1109
        %v1112 = vshrl.u32 %v1045, 16
        %v1114 = vrot.slane %v1112, 4
        %v1115 = vshll.u32 %v1045, 16
        %v1117 = vrot.slane %v1115, 5
        %v1118 = vor.u32 %v1114, %v1117
        %v1119 = vrot.slane %v1118, 4
        %v1121 = vshll.u32 %v1046, 16
        %v1123 = vrot.slane %v1121, 5
        %v1124 = vsel %vm271, %v1119, %v1123
        %v1125 = vshrl.u32 %v1046, 16
        %v1127 = vrot.slane %v1125, 4
        %v1128 = vor.u32 %v1127, %v1123
        %v1129 = vrot.slane %v1128, 4
        %v1131 = vshll.u32 %v1047, 16
        %v1133 = vrot.slane %v1131, 5
        %v1134 = vsel %vm271, %v1129, %v1133
        %v1136 = vshrl.u32 %v1048, 16
        %v1138 = vrot.slane %v1136, 4
        %v1139 = vshll.u32 %v1048, 16
        %v1141 = vrot.slane %v1139, 5
        %v1142 = vor.u32 %v1138, %v1141
        %v1143 = vrot.slane %v1142, 4
        %v1145 = vshll.u32 %v1049, 16
        %v1147 = vrot.slane %v1145, 5
        %v1148 = vsel %vm271, %v1143, %v1147
        %v1149 = vshrl.u32 %v1049, 16
        %v1151 = vrot.slane %v1149, 4
        %v1152 = vor.u32 %v1151, %v1147
        %v1153 = vrot.slane %v1152, 4
        %v1155 = vshll.u32 %v1050, 16
        %v1157 = vrot.slane %v1155, 5
        %v1158 = vsel %vm271, %v1153, %v1157
        %v1160 = vshrl.u32 %v1051, 16
        %v1162 = vrot.slane %v1160, 4
        %v1163 = vshll.u32 %v1051, 16
        %v1165 = vrot.slane %v1163, 5
        %v1166 = vor.u32 %v1162, %v1165
        %v1167 = vrot.slane %v1166, 4
        %v1169 = vshll.u32 %v1052, 16
        %v1171 = vrot.slane %v1169, 5
        %v1172 = vsel %vm271, %v1167, %v1171
        %v1173 = vshrl.u32 %v1052, 16
        %v1175 = vrot.slane %v1173, 4
        %v1176 = vor.u32 %v1175, %v1171
        %v1177 = vrot.slane %v1176, 4
        %v1179 = vshll.u32 %v1053, 16
        %v1181 = vrot.slane %v1179, 5
        %v1182 = vsel %vm271, %v1177, %v1181
        %v1184 = vshrl.u32 %v1054, 16
        %v1186 = vrot.slane %v1184, 4
        %v1187 = vshll.u32 %v1054, 16
        %v1189 = vrot.slane %v1187, 5
        %v1190 = vor.u32 %v1186, %v1189
        %v1191 = vrot.slane %v1190, 4
        %v1193 = vshll.u32 %v1055, 16
        %v1195 = vrot.slane %v1193, 5
        %v1196 = vsel %vm271, %v1191, %v1195
        %v1197 = vshrl.u32 %v1055, 16
        %v1199 = vrot.slane %v1197, 4
        %v1200 = vor.u32 %v1199, %v1195
        %v1201 = vrot.slane %v1200, 4
        %v1203 = vshll.u32 %v1056, 16
        %v1205 = vrot.slane %v1203, 5
        %v1206 = vsel %vm271, %v1201, %v1205
        %v1208 = vshrl.u32 %v1057, 16
        %v1210 = vrot.slane %v1208, 4
        %v1211 = vshll.u32 %v1057, 16
        %v1213 = vrot.slane %v1211, 5
        %v1214 = vor.u32 %v1210, %v1213
        %v1215 = vrot.slane %v1214, 4
        %v1217 = vshll.u32 %v1058, 16
        %v1219 = vrot.slane %v1217, 5
        %v1220 = vsel %vm271, %v1215, %v1219
        %v1221 = vshrl.u32 %v1058, 16
        %v1223 = vrot.slane %v1221, 4
        %v1224 = vor.u32 %v1223, %v1219
        %v1225 = vrot.slane %v1224, 4
        %v1227 = vshll.u32 %v1059, 16
        %v1229 = vrot.slane %v1227, 5
        %v1230 = vsel %vm271, %v1225, %v1229
        %v1232 = vshrl.u32 %v1060, 16
        %v1234 = vrot.slane %v1232, 4
        %v1235 = vshll.u32 %v1060, 16
        %v1237 = vrot.slane %v1235, 5
        %v1238 = vor.u32 %v1234, %v1237
        %v1239 = vrot.slane %v1238, 4
        %v1241 = vshll.u32 %v1061, 16
        %v1243 = vrot.slane %v1241, 5
        %v1244 = vsel %vm271, %v1239, %v1243
        %v1245 = vshrl.u32 %v1061, 16
        %v1247 = vrot.slane %v1245, 4
        %v1248 = vor.u32 %v1247, %v1243
        %v1249 = vrot.slane %v1248, 4
        %v1251 = vshll.u32 %v1062, 16
        %v1253 = vrot.slane %v1251, 5
        %v1254 = vsel %vm271, %v1249, %v1253
        %s1255 = scalar_lea.vmem %s1, 8
        %v1256 = vld [vmem:[%s1255] sm:$0x3]
        %v1257 = vunpack.c.l.b16 %v1076
        %v1258 = vunpack.c.l.b16 %v1086
        %v1259 = vunpack.c.l.b16 %v1100
        %v1260 = vunpack.c.l.b16 %v1110
        %v1261 = vunpack.c.l.b16 %v1124
        %v1262 = vunpack.c.l.b16 %v1134
        %v1263 = vunpack.c.l.b16 %v1148
        %v1264 = vunpack.c.l.b16 %v1158
        %v1265 = vunpack.c.l.b16 %v1172
        %v1266 = vunpack.c.l.b16 %v1182
        %v1267 = vunpack.c.l.b16 %v1196
        %v1268 = vunpack.c.l.b16 %v1206
        %v1269 = vunpack.c.l.b16 %v1220
        %v1270 = vunpack.c.l.b16 %v1230
        %v1271 = vunpack.c.l.b16 %v1244
        %v1272 = vunpack.c.l.b16 %v1254
        %v1273 = vpack.c.b16 %v1258, %v1257
        %v1274 = vpack.c.b16 %v1260, %v1259
        %v1275 = vpack.c.b16 %v1262, %v1261
        %v1276 = vpack.c.b16 %v1264, %v1263
        %v1277 = vpack.c.b16 %v1266, %v1265
        %v1278 = vpack.c.b16 %v1268, %v1267
        %v1279 = vpack.c.b16 %v1270, %v1269
        %v1280 = vpack.c.b16 %v1272, %v1271
        %v1282 = vsel %vm490, %v1273, 0
        %v1285 = vsel %vm490, %v1274, 0
        %v1288 = vsel %vm490, %v1275, 0
        %v1291 = vsel %vm490, %v1276, 0
        %v1294 = vsel %vm490, %v1277, 0
        %v1297 = vsel %vm490, %v1278, 0
        %v1300 = vsel %vm490, %v1279, 0
        %v1303 = vsel %vm490, %v1280, 0
        %v1306 = vsel %vm515, %v1256, 0
        %1308 = vmatpush.bf16.msra.mxu0 0
        %1309 = vmatpush.bf16.msra.mxu0 0
        %1310 = vmatpush.bf16.msra.mxu0 0
        %1311 = vmatpush.bf16.msra.mxu0 0
        %1312 = vmatpush.bf16.msra.mxu0 0
        %1313 = vmatpush.bf16.msra.mxu0 0
        %1314 = vmatpush.bf16.msra.mxu0 0
        %1315 = vmatpush.bf16.msra.mxu0 %v1306
        %1316 = vmatmul.bf16.gmra.mxu0 %v1282
        %v1317 = vpop.f32.mrf.mxu0
        %v1318 = vadd.f32 0.0, %v1317
        %v1319 = vpop.f32.mrf.mxu0
        %v1320 = vadd.f32 0.0, %v1319
        %1321 = vmatmul.bf16.gmra.mxu0 %v1285
        %v1322 = vpop.f32.mrf.mxu0
        %v1323 = vadd.f32 0.0, %v1322
        %v1324 = vpop.f32.mrf.mxu0
        %v1325 = vadd.f32 0.0, %v1324
        %1326 = vmatmul.bf16.gmra.mxu0 %v1288
        %v1327 = vpop.f32.mrf.mxu0
        %v1328 = vadd.f32 0.0, %v1327
        %v1329 = vpop.f32.mrf.mxu0
        %v1330 = vadd.f32 0.0, %v1329
        %1331 = vmatmul.bf16.gmra.mxu0 %v1291
        %v1332 = vpop.f32.mrf.mxu0
        %v1333 = vadd.f32 0.0, %v1332
        %v1334 = vpop.f32.mrf.mxu0
        %v1335 = vadd.f32 0.0, %v1334
        %1336 = vmatmul.bf16.gmra.mxu0 %v1294
        %v1337 = vpop.f32.mrf.mxu0
        %v1338 = vadd.f32 0.0, %v1337
        %v1339 = vpop.f32.mrf.mxu0
        %v1340 = vadd.f32 0.0, %v1339
        %1341 = vmatmul.bf16.gmra.mxu0 %v1297
        %v1342 = vpop.f32.mrf.mxu0
        %v1343 = vadd.f32 0.0, %v1342
        %v1344 = vpop.f32.mrf.mxu0
        %v1345 = vadd.f32 0.0, %v1344
        %1346 = vmatmul.bf16.gmra.mxu0 %v1300
        %v1347 = vpop.f32.mrf.mxu0
        %v1348 = vadd.f32 0.0, %v1347
        %v1349 = vpop.f32.mrf.mxu0
        %v1350 = vadd.f32 0.0, %v1349
        %1351 = vmatmul.bf16.gmra.mxu0 %v1303
        %v1352 = vpop.f32.mrf.mxu0
        %v1353 = vadd.f32 0.0, %v1352
        %v1354 = vpop.f32.mrf.mxu0
        %v1355 = vadd.f32 0.0, %v1354
        %1356 = vdwg.mxu0
        %v1357 = vadd.f32 %v1023, %v1318
        %v1358 = vadd.f32 %v1024, %v1320
        %v1359 = vadd.f32 %v1025, %v1323
        %v1360 = vadd.f32 %v1026, %v1325
        %v1361 = vadd.f32 %v1027, %v1328
        %v1362 = vadd.f32 %v1028, %v1330
        %v1363 = vadd.f32 %v1029, %v1333
        %v1364 = vadd.f32 %v1030, %v1335
        %v1365 = vadd.f32 %v1031, %v1338
        %v1366 = vadd.f32 %v1032, %v1340
        %v1367 = vadd.f32 %v1033, %v1343
        %v1368 = vadd.f32 %v1034, %v1345
        %v1369 = vadd.f32 %v1035, %v1348
        %v1370 = vadd.f32 %v1036, %v1350
        %v1371 = vadd.f32 %v1037, %v1353
        %v1372 = vadd.f32 %v1038, %v1355
        %v1373 = vld [vmem:[%s888] sm:$0xe]
        %v1374 = vld [vmem:[%s888 + $0xc] sm:$0xe]
        %v1375 = vld [vmem:[%s888 + $0x18] sm:$0xe]
        %v1376 = vld [vmem:[%s888 + $0x24] sm:$0xe]
        %v1377 = vld [vmem:[%s888 + $0x30] sm:$0xe]
        %v1378 = vld [vmem:[%s888 + $0x3c] sm:$0xe]
        %v1379 = vld [vmem:[%s888 + $0x48] sm:$0xe]
        %v1380 = vld [vmem:[%s888 + $0x54] sm:$0xe]
        %v1405 = vrot.slane %v1373, 5
        %v1406 = vrot.slane %v1405, 4
        %v1407 = vrot.slane %v1040, 5
        %v1408 = vsel %vm710, %v1406, %v1407
        %v1409 = vrot.slane %v1407, 4
        %v1410 = vrot.slane %v1041, 5
        %v1411 = vsel %vm710, %v1409, %v1410
        %v1412 = vrot.slane %v1374, 5
        %v1413 = vrot.slane %v1412, 4
        %v1414 = vrot.slane %v1043, 5
        %v1415 = vsel %vm710, %v1413, %v1414
        %v1416 = vrot.slane %v1414, 4
        %v1417 = vrot.slane %v1044, 5
        %v1418 = vsel %vm710, %v1416, %v1417
        %v1419 = vrot.slane %v1375, 5
        %v1420 = vrot.slane %v1419, 4
        %v1421 = vrot.slane %v1046, 5
        %v1422 = vsel %vm710, %v1420, %v1421
        %v1423 = vrot.slane %v1421, 4
        %v1424 = vrot.slane %v1047, 5
        %v1425 = vsel %vm710, %v1423, %v1424
        %v1426 = vrot.slane %v1376, 5
        %v1427 = vrot.slane %v1426, 4
        %v1428 = vrot.slane %v1049, 5
        %v1429 = vsel %vm710, %v1427, %v1428
        %v1430 = vrot.slane %v1428, 4
        %v1431 = vrot.slane %v1050, 5
        %v1432 = vsel %vm710, %v1430, %v1431
        %v1433 = vrot.slane %v1377, 5
        %v1434 = vrot.slane %v1433, 4
        %v1435 = vrot.slane %v1052, 5
        %v1436 = vsel %vm710, %v1434, %v1435
        %v1437 = vrot.slane %v1435, 4
        %v1438 = vrot.slane %v1053, 5
        %v1439 = vsel %vm710, %v1437, %v1438
        %v1440 = vrot.slane %v1378, 5
        %v1441 = vrot.slane %v1440, 4
        %v1442 = vrot.slane %v1055, 5
        %v1443 = vsel %vm710, %v1441, %v1442
        %v1444 = vrot.slane %v1442, 4
        %v1445 = vrot.slane %v1056, 5
        %v1446 = vsel %vm710, %v1444, %v1445
        %v1447 = vrot.slane %v1379, 5
        %v1448 = vrot.slane %v1447, 4
        %v1449 = vrot.slane %v1058, 5
        %v1450 = vsel %vm710, %v1448, %v1449
        %v1451 = vrot.slane %v1449, 4
        %v1452 = vrot.slane %v1059, 5
        %v1453 = vsel %vm710, %v1451, %v1452
        %v1454 = vrot.slane %v1380, 5
        %v1455 = vrot.slane %v1454, 4
        %v1456 = vrot.slane %v1061, 5
        %v1457 = vsel %vm710, %v1455, %v1456
        %v1458 = vrot.slane %v1456, 4
        %v1459 = vrot.slane %v1062, 5
        %v1460 = vsel %vm710, %v1458, %v1459
        %s1461 = scalar_lea.vmem %s1, 10
        %v1462 = vld [vmem:[%s1461] sm:$0x3]
        %v1463 = vunpack.c.l.b16 %v1408
        %v1464 = vunpack.c.l.b16 %v1411
        %v1465 = vunpack.c.l.b16 %v1415
        %v1466 = vunpack.c.l.b16 %v1418
        %v1467 = vunpack.c.l.b16 %v1422
        %v1468 = vunpack.c.l.b16 %v1425
        %v1469 = vunpack.c.l.b16 %v1429
        %v1470 = vunpack.c.l.b16 %v1432
        %v1471 = vunpack.c.l.b16 %v1436
        %v1472 = vunpack.c.l.b16 %v1439
        %v1473 = vunpack.c.l.b16 %v1443
        %v1474 = vunpack.c.l.b16 %v1446
        %v1475 = vunpack.c.l.b16 %v1450
        %v1476 = vunpack.c.l.b16 %v1453
        %v1477 = vunpack.c.l.b16 %v1457
        %v1478 = vunpack.c.l.b16 %v1460
        %v1479 = vpack.c.b16 %v1464, %v1463
        %v1480 = vpack.c.b16 %v1466, %v1465
        %v1481 = vpack.c.b16 %v1468, %v1467
        %v1482 = vpack.c.b16 %v1470, %v1469
        %v1483 = vpack.c.b16 %v1472, %v1471
        %v1484 = vpack.c.b16 %v1474, %v1473
        %v1485 = vpack.c.b16 %v1476, %v1475
        %v1486 = vpack.c.b16 %v1478, %v1477
        %v1488 = vsel %vm490, %v1479, 0
        %v1491 = vsel %vm490, %v1480, 0
        %v1494 = vsel %vm490, %v1481, 0
        %v1497 = vsel %vm490, %v1482, 0
        %v1500 = vsel %vm490, %v1483, 0
        %v1503 = vsel %vm490, %v1484, 0
        %v1506 = vsel %vm490, %v1485, 0
        %v1509 = vsel %vm490, %v1486, 0
        %v1512 = vsel %vm515, %v1462, 0
        %1514 = vmatpush.bf16.msra.mxu0 0
        %1515 = vmatpush.bf16.msra.mxu0 0
        %1516 = vmatpush.bf16.msra.mxu0 0
        %1517 = vmatpush.bf16.msra.mxu0 0
        %1518 = vmatpush.bf16.msra.mxu0 0
        %1519 = vmatpush.bf16.msra.mxu0 0
        %1520 = vmatpush.bf16.msra.mxu0 0
        %1521 = vmatpush.bf16.msra.mxu0 %v1512
        %1522 = vmatmul.bf16.gmra.mxu0 %v1488
        %v1523 = vpop.f32.mrf.mxu0
        %v1524 = vadd.f32 0.0, %v1523
        %v1525 = vpop.f32.mrf.mxu0
        %v1526 = vadd.f32 0.0, %v1525
        %1527 = vmatmul.bf16.gmra.mxu0 %v1491
        %v1528 = vpop.f32.mrf.mxu0
        %v1529 = vadd.f32 0.0, %v1528
        %v1530 = vpop.f32.mrf.mxu0
        %v1531 = vadd.f32 0.0, %v1530
        %1532 = vmatmul.bf16.gmra.mxu0 %v1494
        %v1533 = vpop.f32.mrf.mxu0
        %v1534 = vadd.f32 0.0, %v1533
        %v1535 = vpop.f32.mrf.mxu0
        %v1536 = vadd.f32 0.0, %v1535
        %1537 = vmatmul.bf16.gmra.mxu0 %v1497
        %v1538 = vpop.f32.mrf.mxu0
        %v1539 = vadd.f32 0.0, %v1538
        %v1540 = vpop.f32.mrf.mxu0
        %v1541 = vadd.f32 0.0, %v1540
        %1542 = vmatmul.bf16.gmra.mxu0 %v1500
        %v1543 = vpop.f32.mrf.mxu0
        %v1544 = vadd.f32 0.0, %v1543
        %v1545 = vpop.f32.mrf.mxu0
        %v1546 = vadd.f32 0.0, %v1545
        %1547 = vmatmul.bf16.gmra.mxu0 %v1503
        %v1548 = vpop.f32.mrf.mxu0
        %v1549 = vadd.f32 0.0, %v1548
        %v1550 = vpop.f32.mrf.mxu0
        %v1551 = vadd.f32 0.0, %v1550
        %1552 = vmatmul.bf16.gmra.mxu0 %v1506
        %v1553 = vpop.f32.mrf.mxu0
        %v1554 = vadd.f32 0.0, %v1553
        %v1555 = vpop.f32.mrf.mxu0
        %v1556 = vadd.f32 0.0, %v1555
        %1557 = vmatmul.bf16.gmra.mxu0 %v1509
        %v1558 = vpop.f32.mrf.mxu0
        %v1559 = vadd.f32 0.0, %v1558
        %v1560 = vpop.f32.mrf.mxu0
        %v1561 = vadd.f32 0.0, %v1560
        %1562 = vdwg.mxu0
        %v1563 = vadd.f32 %v1357, %v1524
        %v1564 = vadd.f32 %v1358, %v1526
        %v1565 = vadd.f32 %v1359, %v1529
        %v1566 = vadd.f32 %v1360, %v1531
        %v1567 = vadd.f32 %v1361, %v1534
        %v1568 = vadd.f32 %v1362, %v1536
        %v1569 = vadd.f32 %v1363, %v1539
        %v1570 = vadd.f32 %v1364, %v1541
        %v1571 = vadd.f32 %v1365, %v1544
        %v1572 = vadd.f32 %v1366, %v1546
        %v1573 = vadd.f32 %v1367, %v1549
        %v1574 = vadd.f32 %v1368, %v1551
        %v1575 = vadd.f32 %v1369, %v1554
        %v1576 = vadd.f32 %v1370, %v1556
        %v1577 = vadd.f32 %v1371, %v1559
        %v1578 = vadd.f32 %v1372, %v1561
        %s1579 = sadd.s32 %s235, 2
        %s1580 = smul.u32 %s1579, 3
        %s1581 = smul.addr %s1580, 4
        %s1582 = scalar_lea.vmem %s233, %s1581
        %v1583 = vld [vmem:[%s1582] sm:$0xf]
        %v1584 = vld [vmem:[%s1582 + $0x4] sm:$0xf]
        %v1585 = vld [vmem:[%s1582 + $0xc] sm:$0xf]
        %v1586 = vld [vmem:[%s1582 + $0x10] sm:$0xf]
        %v1587 = vld [vmem:[%s1582 + $0x18] sm:$0xf]
        %v1588 = vld [vmem:[%s1582 + $0x1c] sm:$0xf]
        %v1589 = vld [vmem:[%s1582 + $0x24] sm:$0xf]
        %v1590 = vld [vmem:[%s1582 + $0x28] sm:$0xf]
        %v1591 = vld [vmem:[%s1582 + $0x30] sm:$0xf]
        %v1592 = vld [vmem:[%s1582 + $0x34] sm:$0xf]
        %v1593 = vld [vmem:[%s1582 + $0x3c] sm:$0xf]
        %v1594 = vld [vmem:[%s1582 + $0x40] sm:$0xf]
        %v1595 = vld [vmem:[%s1582 + $0x48] sm:$0xf]
        %v1596 = vld [vmem:[%s1582 + $0x4c] sm:$0xf]
        %v1597 = vld [vmem:[%s1582 + $0x54] sm:$0xf]
        %v1598 = vld [vmem:[%s1582 + $0x58] sm:$0xf]
        %s1599 = scalar_lea.vmem %s1, 12
        %v1600 = vld [vmem:[%s1599] sm:$0x3]
        %v1617 = vunpack.c.l.b16 %v1583
        %v1618 = vunpack.c.l.b16 %v1584
        %v1619 = vunpack.c.l.b16 %v1585
        %v1620 = vunpack.c.l.b16 %v1586
        %v1621 = vunpack.c.l.b16 %v1587
        %v1622 = vunpack.c.l.b16 %v1588
        %v1623 = vunpack.c.l.b16 %v1589
        %v1624 = vunpack.c.l.b16 %v1590
        %v1625 = vunpack.c.l.b16 %v1591
        %v1626 = vunpack.c.l.b16 %v1592
        %v1627 = vunpack.c.l.b16 %v1593
        %v1628 = vunpack.c.l.b16 %v1594
        %v1629 = vunpack.c.l.b16 %v1595
        %v1630 = vunpack.c.l.b16 %v1596
        %v1631 = vunpack.c.l.b16 %v1597
        %v1632 = vunpack.c.l.b16 %v1598
        %v1633 = vpack.c.b16 %v1618, %v1617
        %v1634 = vpack.c.b16 %v1620, %v1619
        %v1635 = vpack.c.b16 %v1622, %v1621
        %v1636 = vpack.c.b16 %v1624, %v1623
        %v1637 = vpack.c.b16 %v1626, %v1625
        %v1638 = vpack.c.b16 %v1628, %v1627
        %v1639 = vpack.c.b16 %v1630, %v1629
        %v1640 = vpack.c.b16 %v1632, %v1631
        %v1642 = vsel %vm490, %v1633, 0
        %v1645 = vsel %vm490, %v1634, 0
        %v1648 = vsel %vm490, %v1635, 0
        %v1651 = vsel %vm490, %v1636, 0
        %v1654 = vsel %vm490, %v1637, 0
        %v1657 = vsel %vm490, %v1638, 0
        %v1660 = vsel %vm490, %v1639, 0
        %v1663 = vsel %vm490, %v1640, 0
        %v1666 = vsel %vm515, %v1600, 0
        %1668 = vmatpush.bf16.msra.mxu0 0
        %1669 = vmatpush.bf16.msra.mxu0 0
        %1670 = vmatpush.bf16.msra.mxu0 0
        %1671 = vmatpush.bf16.msra.mxu0 0
        %1672 = vmatpush.bf16.msra.mxu0 0
        %1673 = vmatpush.bf16.msra.mxu0 0
        %1674 = vmatpush.bf16.msra.mxu0 0
        %1675 = vmatpush.bf16.msra.mxu0 %v1666
        %1676 = vmatmul.bf16.gmra.mxu0 %v1642
        %v1677 = vpop.f32.mrf.mxu0
        %v1678 = vadd.f32 0.0, %v1677
        %v1679 = vpop.f32.mrf.mxu0
        %v1680 = vadd.f32 0.0, %v1679
        %1681 = vmatmul.bf16.gmra.mxu0 %v1645
        %v1682 = vpop.f32.mrf.mxu0
        %v1683 = vadd.f32 0.0, %v1682
        %v1684 = vpop.f32.mrf.mxu0
        %v1685 = vadd.f32 0.0, %v1684
        %1686 = vmatmul.bf16.gmra.mxu0 %v1648
        %v1687 = vpop.f32.mrf.mxu0
        %v1688 = vadd.f32 0.0, %v1687
        %v1689 = vpop.f32.mrf.mxu0
        %v1690 = vadd.f32 0.0, %v1689
        %1691 = vmatmul.bf16.gmra.mxu0 %v1651
        %v1692 = vpop.f32.mrf.mxu0
        %v1693 = vadd.f32 0.0, %v1692
        %v1694 = vpop.f32.mrf.mxu0
        %v1695 = vadd.f32 0.0, %v1694
        %1696 = vmatmul.bf16.gmra.mxu0 %v1654
        %v1697 = vpop.f32.mrf.mxu0
        %v1698 = vadd.f32 0.0, %v1697
        %v1699 = vpop.f32.mrf.mxu0
        %v1700 = vadd.f32 0.0, %v1699
        %1701 = vmatmul.bf16.gmra.mxu0 %v1657
        %v1702 = vpop.f32.mrf.mxu0
        %v1703 = vadd.f32 0.0, %v1702
        %v1704 = vpop.f32.mrf.mxu0
        %v1705 = vadd.f32 0.0, %v1704
        %1706 = vmatmul.bf16.gmra.mxu0 %v1660
        %v1707 = vpop.f32.mrf.mxu0
        %v1708 = vadd.f32 0.0, %v1707
        %v1709 = vpop.f32.mrf.mxu0
        %v1710 = vadd.f32 0.0, %v1709
        %1711 = vmatmul.bf16.gmra.mxu0 %v1663
        %v1712 = vpop.f32.mrf.mxu0
        %v1713 = vadd.f32 0.0, %v1712
        %v1714 = vpop.f32.mrf.mxu0
        %v1715 = vadd.f32 0.0, %v1714
        %1716 = vdwg.mxu0
        %v1717 = vadd.f32 %v1563, %v1678
        %v1718 = vadd.f32 %v1564, %v1680
        %v1719 = vadd.f32 %v1565, %v1683
        %v1720 = vadd.f32 %v1566, %v1685
        %v1721 = vadd.f32 %v1567, %v1688
        %v1722 = vadd.f32 %v1568, %v1690
        %v1723 = vadd.f32 %v1569, %v1693
        %v1724 = vadd.f32 %v1570, %v1695
        %v1725 = vadd.f32 %v1571, %v1698
        %v1726 = vadd.f32 %v1572, %v1700
        %v1727 = vadd.f32 %v1573, %v1703
        %v1728 = vadd.f32 %v1574, %v1705
        %v1729 = vadd.f32 %v1575, %v1708
        %v1730 = vadd.f32 %v1576, %v1710
        %v1731 = vadd.f32 %v1577, %v1713
        %v1732 = vadd.f32 %v1578, %v1715
        %v1733 = vld [vmem:[%s1582] sm:$0xf]
        %v1734 = vld [vmem:[%s1582 + $0x4] sm:$0xf]
        %v1735 = vld [vmem:[%s1582 + $0x8] sm:$0x1]
        %v1736 = vld [vmem:[%s1582 + $0xc] sm:$0xf]
        %v1737 = vld [vmem:[%s1582 + $0x10] sm:$0xf]
        %v1738 = vld [vmem:[%s1582 + $0x14] sm:$0x1]
        %v1739 = vld [vmem:[%s1582 + $0x18] sm:$0xf]
        %v1740 = vld [vmem:[%s1582 + $0x1c] sm:$0xf]
        %v1741 = vld [vmem:[%s1582 + $0x20] sm:$0x1]
        %v1742 = vld [vmem:[%s1582 + $0x24] sm:$0xf]
        %v1743 = vld [vmem:[%s1582 + $0x28] sm:$0xf]
        %v1744 = vld [vmem:[%s1582 + $0x2c] sm:$0x1]
        %v1745 = vld [vmem:[%s1582 + $0x30] sm:$0xf]
        %v1746 = vld [vmem:[%s1582 + $0x34] sm:$0xf]
        %v1747 = vld [vmem:[%s1582 + $0x38] sm:$0x1]
        %v1748 = vld [vmem:[%s1582 + $0x3c] sm:$0xf]
        %v1749 = vld [vmem:[%s1582 + $0x40] sm:$0xf]
        %v1750 = vld [vmem:[%s1582 + $0x44] sm:$0x1]
        %v1751 = vld [vmem:[%s1582 + $0x48] sm:$0xf]
        %v1752 = vld [vmem:[%s1582 + $0x4c] sm:$0xf]
        %v1753 = vld [vmem:[%s1582 + $0x50] sm:$0x1]
        %v1754 = vld [vmem:[%s1582 + $0x54] sm:$0xf]
        %v1755 = vld [vmem:[%s1582 + $0x58] sm:$0xf]
        %v1756 = vld [vmem:[%s1582 + $0x5c] sm:$0x1]
        %v1758 = vshrl.u32 %v1733, 16
        %v1760 = vrot.slane %v1758, 4
        %v1761 = vshll.u32 %v1733, 16
        %v1763 = vrot.slane %v1761, 5
        %v1764 = vor.u32 %v1760, %v1763
        %v1765 = vrot.slane %v1764, 4
        %v1767 = vshll.u32 %v1734, 16
        %v1769 = vrot.slane %v1767, 5
        %v1770 = vsel %vm271, %v1765, %v1769
        %v1771 = vshrl.u32 %v1734, 16
        %v1773 = vrot.slane %v1771, 4
        %v1774 = vor.u32 %v1773, %v1769
        %v1775 = vrot.slane %v1774, 4
        %v1777 = vshll.u32 %v1735, 16
        %v1779 = vrot.slane %v1777, 5
        %v1780 = vsel %vm271, %v1775, %v1779
        %v1782 = vshrl.u32 %v1736, 16
        %v1784 = vrot.slane %v1782, 4
        %v1785 = vshll.u32 %v1736, 16
        %v1787 = vrot.slane %v1785, 5
        %v1788 = vor.u32 %v1784, %v1787
        %v1789 = vrot.slane %v1788, 4
        %v1791 = vshll.u32 %v1737, 16
        %v1793 = vrot.slane %v1791, 5
        %v1794 = vsel %vm271, %v1789, %v1793
        %v1795 = vshrl.u32 %v1737, 16
        %v1797 = vrot.slane %v1795, 4
        %v1798 = vor.u32 %v1797, %v1793
        %v1799 = vrot.slane %v1798, 4
        %v1801 = vshll.u32 %v1738, 16
        %v1803 = vrot.slane %v1801, 5
        %v1804 = vsel %vm271, %v1799, %v1803
        %v1806 = vshrl.u32 %v1739, 16
        %v1808 = vrot.slane %v1806, 4
        %v1809 = vshll.u32 %v1739, 16
        %v1811 = vrot.slane %v1809, 5
        %v1812 = vor.u32 %v1808, %v1811
        %v1813 = vrot.slane %v1812, 4
        %v1815 = vshll.u32 %v1740, 16
        %v1817 = vrot.slane %v1815, 5
        %v1818 = vsel %vm271, %v1813, %v1817
        %v1819 = vshrl.u32 %v1740, 16
        %v1821 = vrot.slane %v1819, 4
        %v1822 = vor.u32 %v1821, %v1817
        %v1823 = vrot.slane %v1822, 4
        %v1825 = vshll.u32 %v1741, 16
        %v1827 = vrot.slane %v1825, 5
        %v1828 = vsel %vm271, %v1823, %v1827
        %v1830 = vshrl.u32 %v1742, 16
        %v1832 = vrot.slane %v1830, 4
        %v1833 = vshll.u32 %v1742, 16
        %v1835 = vrot.slane %v1833, 5
        %v1836 = vor.u32 %v1832, %v1835
        %v1837 = vrot.slane %v1836, 4
        %v1839 = vshll.u32 %v1743, 16
        %v1841 = vrot.slane %v1839, 5
        %v1842 = vsel %vm271, %v1837, %v1841
        %v1843 = vshrl.u32 %v1743, 16
        %v1845 = vrot.slane %v1843, 4
        %v1846 = vor.u32 %v1845, %v1841
        %v1847 = vrot.slane %v1846, 4
        %v1849 = vshll.u32 %v1744, 16
        %v1851 = vrot.slane %v1849, 5
        %v1852 = vsel %vm271, %v1847, %v1851
        %v1854 = vshrl.u32 %v1745, 16
        %v1856 = vrot.slane %v1854, 4
        %v1857 = vshll.u32 %v1745, 16
        %v1859 = vrot.slane %v1857, 5
        %v1860 = vor.u32 %v1856, %v1859
        %v1861 = vrot.slane %v1860, 4
        %v1863 = vshll.u32 %v1746, 16
        %v1865 = vrot.slane %v1863, 5
        %v1866 = vsel %vm271, %v1861, %v1865
        %v1867 = vshrl.u32 %v1746, 16
        %v1869 = vrot.slane %v1867, 4
        %v1870 = vor.u32 %v1869, %v1865
        %v1871 = vrot.slane %v1870, 4
        %v1873 = vshll.u32 %v1747, 16
        %v1875 = vrot.slane %v1873, 5
        %v1876 = vsel %vm271, %v1871, %v1875
        %v1878 = vshrl.u32 %v1748, 16
        %v1880 = vrot.slane %v1878, 4
        %v1881 = vshll.u32 %v1748, 16
        %v1883 = vrot.slane %v1881, 5
        %v1884 = vor.u32 %v1880, %v1883
        %v1885 = vrot.slane %v1884, 4
        %v1887 = vshll.u32 %v1749, 16
        %v1889 = vrot.slane %v1887, 5
        %v1890 = vsel %vm271, %v1885, %v1889
        %v1891 = vshrl.u32 %v1749, 16
        %v1893 = vrot.slane %v1891, 4
        %v1894 = vor.u32 %v1893, %v1889
        %v1895 = vrot.slane %v1894, 4
        %v1897 = vshll.u32 %v1750, 16
        %v1899 = vrot.slane %v1897, 5
        %v1900 = vsel %vm271, %v1895, %v1899
        %v1902 = vshrl.u32 %v1751, 16
        %v1904 = vrot.slane %v1902, 4
        %v1905 = vshll.u32 %v1751, 16
        %v1907 = vrot.slane %v1905, 5
        %v1908 = vor.u32 %v1904, %v1907
        %v1909 = vrot.slane %v1908, 4
        %v1911 = vshll.u32 %v1752, 16
        %v1913 = vrot.slane %v1911, 5
        %v1914 = vsel %vm271, %v1909, %v1913
        %v1915 = vshrl.u32 %v1752, 16
        %v1917 = vrot.slane %v1915, 4
        %v1918 = vor.u32 %v1917, %v1913
        %v1919 = vrot.slane %v1918, 4
        %v1921 = vshll.u32 %v1753, 16
        %v1923 = vrot.slane %v1921, 5
        %v1924 = vsel %vm271, %v1919, %v1923
        %v1926 = vshrl.u32 %v1754, 16
        %v1928 = vrot.slane %v1926, 4
        %v1929 = vshll.u32 %v1754, 16
        %v1931 = vrot.slane %v1929, 5
        %v1932 = vor.u32 %v1928, %v1931
        %v1933 = vrot.slane %v1932, 4
        %v1935 = vshll.u32 %v1755, 16
        %v1937 = vrot.slane %v1935, 5
        %v1938 = vsel %vm271, %v1933, %v1937
        %v1939 = vshrl.u32 %v1755, 16
        %v1941 = vrot.slane %v1939, 4
        %v1942 = vor.u32 %v1941, %v1937
        %v1943 = vrot.slane %v1942, 4
        %v1945 = vshll.u32 %v1756, 16
        %v1947 = vrot.slane %v1945, 5
        %v1948 = vsel %vm271, %v1943, %v1947
        %s1949 = scalar_lea.vmem %s1, 14
        %v1950 = vld [vmem:[%s1949] sm:$0x3]
        %v1951 = vunpack.c.l.b16 %v1770
        %v1952 = vunpack.c.l.b16 %v1780
        %v1953 = vunpack.c.l.b16 %v1794
        %v1954 = vunpack.c.l.b16 %v1804
        %v1955 = vunpack.c.l.b16 %v1818
        %v1956 = vunpack.c.l.b16 %v1828
        %v1957 = vunpack.c.l.b16 %v1842
        %v1958 = vunpack.c.l.b16 %v1852
        %v1959 = vunpack.c.l.b16 %v1866
        %v1960 = vunpack.c.l.b16 %v1876
        %v1961 = vunpack.c.l.b16 %v1890
        %v1962 = vunpack.c.l.b16 %v1900
        %v1963 = vunpack.c.l.b16 %v1914
        %v1964 = vunpack.c.l.b16 %v1924
        %v1965 = vunpack.c.l.b16 %v1938
        %v1966 = vunpack.c.l.b16 %v1948
        %v1967 = vpack.c.b16 %v1952, %v1951
        %v1968 = vpack.c.b16 %v1954, %v1953
        %v1969 = vpack.c.b16 %v1956, %v1955
        %v1970 = vpack.c.b16 %v1958, %v1957
        %v1971 = vpack.c.b16 %v1960, %v1959
        %v1972 = vpack.c.b16 %v1962, %v1961
        %v1973 = vpack.c.b16 %v1964, %v1963
        %v1974 = vpack.c.b16 %v1966, %v1965
        %v1976 = vsel %vm490, %v1967, 0
        %v1979 = vsel %vm490, %v1968, 0
        %v1982 = vsel %vm490, %v1969, 0
        %v1985 = vsel %vm490, %v1970, 0
        %v1988 = vsel %vm490, %v1971, 0
        %v1991 = vsel %vm490, %v1972, 0
        %v1994 = vsel %vm490, %v1973, 0
        %v1997 = vsel %vm490, %v1974, 0
        %v2000 = vsel %vm515, %v1950, 0
        %2002 = vmatpush.bf16.msra.mxu0 0
        %2003 = vmatpush.bf16.msra.mxu0 0
        %2004 = vmatpush.bf16.msra.mxu0 0
        %2005 = vmatpush.bf16.msra.mxu0 0
        %2006 = vmatpush.bf16.msra.mxu0 0
        %2007 = vmatpush.bf16.msra.mxu0 0
        %2008 = vmatpush.bf16.msra.mxu0 0
        %2009 = vmatpush.bf16.msra.mxu0 %v2000
        %2010 = vmatmul.bf16.gmra.mxu0 %v1976
        %v2011 = vpop.f32.mrf.mxu0
        %v2012 = vadd.f32 0.0, %v2011
        %v2013 = vpop.f32.mrf.mxu0
        %v2014 = vadd.f32 0.0, %v2013
        %2015 = vmatmul.bf16.gmra.mxu0 %v1979
        %v2016 = vpop.f32.mrf.mxu0
        %v2017 = vadd.f32 0.0, %v2016
        %v2018 = vpop.f32.mrf.mxu0
        %v2019 = vadd.f32 0.0, %v2018
        %2020 = vmatmul.bf16.gmra.mxu0 %v1982
        %v2021 = vpop.f32.mrf.mxu0
        %v2022 = vadd.f32 0.0, %v2021
        %v2023 = vpop.f32.mrf.mxu0
        %v2024 = vadd.f32 0.0, %v2023
        %2025 = vmatmul.bf16.gmra.mxu0 %v1985
        %v2026 = vpop.f32.mrf.mxu0
        %v2027 = vadd.f32 0.0, %v2026
        %v2028 = vpop.f32.mrf.mxu0
        %v2029 = vadd.f32 0.0, %v2028
        %2030 = vmatmul.bf16.gmra.mxu0 %v1988
        %v2031 = vpop.f32.mrf.mxu0
        %v2032 = vadd.f32 0.0, %v2031
        %v2033 = vpop.f32.mrf.mxu0
        %v2034 = vadd.f32 0.0, %v2033
        %2035 = vmatmul.bf16.gmra.mxu0 %v1991
        %v2036 = vpop.f32.mrf.mxu0
        %v2037 = vadd.f32 0.0, %v2036
        %v2038 = vpop.f32.mrf.mxu0
        %v2039 = vadd.f32 0.0, %v2038
        %2040 = vmatmul.bf16.gmra.mxu0 %v1994
        %v2041 = vpop.f32.mrf.mxu0
        %v2042 = vadd.f32 0.0, %v2041
        %v2043 = vpop.f32.mrf.mxu0
        %v2044 = vadd.f32 0.0, %v2043
        %2045 = vmatmul.bf16.gmra.mxu0 %v1997
        %v2046 = vpop.f32.mrf.mxu0
        %v2047 = vadd.f32 0.0, %v2046
        %v2048 = vpop.f32.mrf.mxu0
        %v2049 = vadd.f32 0.0, %v2048
        %2050 = vdwg.mxu0
        %v2051 = vadd.f32 %v1717, %v2012
        %v2052 = vadd.f32 %v1718, %v2014
        %v2053 = vadd.f32 %v1719, %v2017
        %v2054 = vadd.f32 %v1720, %v2019
        %v2055 = vadd.f32 %v1721, %v2022
        %v2056 = vadd.f32 %v1722, %v2024
        %v2057 = vadd.f32 %v1723, %v2027
        %v2058 = vadd.f32 %v1724, %v2029
        %v2059 = vadd.f32 %v1725, %v2032
        %v2060 = vadd.f32 %v1726, %v2034
        %v2061 = vadd.f32 %v1727, %v2037
        %v2062 = vadd.f32 %v1728, %v2039
        %v2063 = vadd.f32 %v1729, %v2042
        %v2064 = vadd.f32 %v1730, %v2044
        %v2065 = vadd.f32 %v1731, %v2047
        %v2066 = vadd.f32 %v1732, %v2049
        %v2067 = vld [vmem:[%s1582] sm:$0xe]
        %v2068 = vld [vmem:[%s1582 + $0xc] sm:$0xe]
        %v2069 = vld [vmem:[%s1582 + $0x18] sm:$0xe]
        %v2070 = vld [vmem:[%s1582 + $0x24] sm:$0xe]
        %v2071 = vld [vmem:[%s1582 + $0x30] sm:$0xe]
        %v2072 = vld [vmem:[%s1582 + $0x3c] sm:$0xe]
        %v2073 = vld [vmem:[%s1582 + $0x48] sm:$0xe]
        %v2074 = vld [vmem:[%s1582 + $0x54] sm:$0xe]
        %v2099 = vrot.slane %v2067, 5
        %v2100 = vrot.slane %v2099, 4
        %v2101 = vrot.slane %v1734, 5
        %v2102 = vsel %vm710, %v2100, %v2101
        %v2103 = vrot.slane %v2101, 4
        %v2104 = vrot.slane %v1735, 5
        %v2105 = vsel %vm710, %v2103, %v2104
        %v2106 = vrot.slane %v2068, 5
        %v2107 = vrot.slane %v2106, 4
        %v2108 = vrot.slane %v1737, 5
        %v2109 = vsel %vm710, %v2107, %v2108
        %v2110 = vrot.slane %v2108, 4
        %v2111 = vrot.slane %v1738, 5
        %v2112 = vsel %vm710, %v2110, %v2111
        %v2113 = vrot.slane %v2069, 5
        %v2114 = vrot.slane %v2113, 4
        %v2115 = vrot.slane %v1740, 5
        %v2116 = vsel %vm710, %v2114, %v2115
        %v2117 = vrot.slane %v2115, 4
        %v2118 = vrot.slane %v1741, 5
        %v2119 = vsel %vm710, %v2117, %v2118
        %v2120 = vrot.slane %v2070, 5
        %v2121 = vrot.slane %v2120, 4
        %v2122 = vrot.slane %v1743, 5
        %v2123 = vsel %vm710, %v2121, %v2122
        %v2124 = vrot.slane %v2122, 4
        %v2125 = vrot.slane %v1744, 5
        %v2126 = vsel %vm710, %v2124, %v2125
        %v2127 = vrot.slane %v2071, 5
        %v2128 = vrot.slane %v2127, 4
        %v2129 = vrot.slane %v1746, 5
        %v2130 = vsel %vm710, %v2128, %v2129
        %v2131 = vrot.slane %v2129, 4
        %v2132 = vrot.slane %v1747, 5
        %v2133 = vsel %vm710, %v2131, %v2132
        %v2134 = vrot.slane %v2072, 5
        %v2135 = vrot.slane %v2134, 4
        %v2136 = vrot.slane %v1749, 5
        %v2137 = vsel %vm710, %v2135, %v2136
        %v2138 = vrot.slane %v2136, 4
        %v2139 = vrot.slane %v1750, 5
        %v2140 = vsel %vm710, %v2138, %v2139
        %v2141 = vrot.slane %v2073, 5
        %v2142 = vrot.slane %v2141, 4
        %v2143 = vrot.slane %v1752, 5
        %v2144 = vsel %vm710, %v2142, %v2143
        %v2145 = vrot.slane %v2143, 4
        %v2146 = vrot.slane %v1753, 5
        %v2147 = vsel %vm710, %v2145, %v2146
        %v2148 = vrot.slane %v2074, 5
        %v2149 = vrot.slane %v2148, 4
        %v2150 = vrot.slane %v1755, 5
        %v2151 = vsel %vm710, %v2149, %v2150
        %v2152 = vrot.slane %v2150, 4
        %v2153 = vrot.slane %v1756, 5
        %v2154 = vsel %vm710, %v2152, %v2153
        %s2155 = scalar_lea.vmem %s1, 16
        %v2156 = vld [vmem:[%s2155] sm:$0x3]
        %v2157 = vunpack.c.l.b16 %v2102
        %v2158 = vunpack.c.l.b16 %v2105
        %v2159 = vunpack.c.l.b16 %v2109
        %v2160 = vunpack.c.l.b16 %v2112
        %v2161 = vunpack.c.l.b16 %v2116
        %v2162 = vunpack.c.l.b16 %v2119
        %v2163 = vunpack.c.l.b16 %v2123
        %v2164 = vunpack.c.l.b16 %v2126
        %v2165 = vunpack.c.l.b16 %v2130
        %v2166 = vunpack.c.l.b16 %v2133
        %v2167 = vunpack.c.l.b16 %v2137
        %v2168 = vunpack.c.l.b16 %v2140
        %v2169 = vunpack.c.l.b16 %v2144
        %v2170 = vunpack.c.l.b16 %v2147
        %v2171 = vunpack.c.l.b16 %v2151
        %v2172 = vunpack.c.l.b16 %v2154
        %v2173 = vpack.c.b16 %v2158, %v2157
        %v2174 = vpack.c.b16 %v2160, %v2159
        %v2175 = vpack.c.b16 %v2162, %v2161
        %v2176 = vpack.c.b16 %v2164, %v2163
        %v2177 = vpack.c.b16 %v2166, %v2165
        %v2178 = vpack.c.b16 %v2168, %v2167
        %v2179 = vpack.c.b16 %v2170, %v2169
        %v2180 = vpack.c.b16 %v2172, %v2171
        %v2182 = vsel %vm490, %v2173, 0
        %v2185 = vsel %vm490, %v2174, 0
        %v2188 = vsel %vm490, %v2175, 0
        %v2191 = vsel %vm490, %v2176, 0
        %v2194 = vsel %vm490, %v2177, 0
        %v2197 = vsel %vm490, %v2178, 0
        %v2200 = vsel %vm490, %v2179, 0
        %v2203 = vsel %vm490, %v2180, 0
        %v2206 = vsel %vm515, %v2156, 0
        %2208 = vmatpush.bf16.msra.mxu0 0
        %2209 = vmatpush.bf16.msra.mxu0 0
        %2210 = vmatpush.bf16.msra.mxu0 0
        %2211 = vmatpush.bf16.msra.mxu0 0
        %2212 = vmatpush.bf16.msra.mxu0 0
        %2213 = vmatpush.bf16.msra.mxu0 0
        %2214 = vmatpush.bf16.msra.mxu0 0
        %2215 = vmatpush.bf16.msra.mxu0 %v2206
        %2216 = vmatmul.bf16.gmra.mxu0 %v2182
        %v2217 = vpop.f32.mrf.mxu0
        %v2218 = vadd.f32 0.0, %v2217
        %v2219 = vpop.f32.mrf.mxu0
        %v2220 = vadd.f32 0.0, %v2219
        %2221 = vmatmul.bf16.gmra.mxu0 %v2185
        %v2222 = vpop.f32.mrf.mxu0
        %v2223 = vadd.f32 0.0, %v2222
        %v2224 = vpop.f32.mrf.mxu0
        %v2225 = vadd.f32 0.0, %v2224
        %2226 = vmatmul.bf16.gmra.mxu0 %v2188
        %v2227 = vpop.f32.mrf.mxu0
        %v2228 = vadd.f32 0.0, %v2227
        %v2229 = vpop.f32.mrf.mxu0
        %v2230 = vadd.f32 0.0, %v2229
        %2231 = vmatmul.bf16.gmra.mxu0 %v2191
        %v2232 = vpop.f32.mrf.mxu0
        %v2233 = vadd.f32 0.0, %v2232
        %v2234 = vpop.f32.mrf.mxu0
        %v2235 = vadd.f32 0.0, %v2234
        %2236 = vmatmul.bf16.gmra.mxu0 %v2194
        %v2237 = vpop.f32.mrf.mxu0
        %v2238 = vadd.f32 0.0, %v2237
        %v2239 = vpop.f32.mrf.mxu0
        %v2240 = vadd.f32 0.0, %v2239
        %2241 = vmatmul.bf16.gmra.mxu0 %v2197
        %v2242 = vpop.f32.mrf.mxu0
        %v2243 = vadd.f32 0.0, %v2242
        %v2244 = vpop.f32.mrf.mxu0
        %v2245 = vadd.f32 0.0, %v2244
        %2246 = vmatmul.bf16.gmra.mxu0 %v2200
        %v2247 = vpop.f32.mrf.mxu0
        %v2248 = vadd.f32 0.0, %v2247
        %v2249 = vpop.f32.mrf.mxu0
        %v2250 = vadd.f32 0.0, %v2249
        %2251 = vmatmul.bf16.gmra.mxu0 %v2203
        %v2252 = vpop.f32.mrf.mxu0
        %v2253 = vadd.f32 0.0, %v2252
        %v2254 = vpop.f32.mrf.mxu0
        %v2255 = vadd.f32 0.0, %v2254
        %2256 = vdwg.mxu0
        %v2257 = vadd.f32 %v2051, %v2218
        %v2258 = vadd.f32 %v2052, %v2220
        %v2259 = vadd.f32 %v2053, %v2223
        %v2260 = vadd.f32 %v2054, %v2225
        %v2261 = vadd.f32 %v2055, %v2228
        %v2262 = vadd.f32 %v2056, %v2230
        %v2263 = vadd.f32 %v2057, %v2233
        %v2264 = vadd.f32 %v2058, %v2235
        %v2265 = vadd.f32 %v2059, %v2238
        %v2266 = vadd.f32 %v2060, %v2240
        %v2267 = vadd.f32 %v2061, %v2243
        %v2268 = vadd.f32 %v2062, %v2245
        %v2269 = vadd.f32 %v2063, %v2248
        %v2270 = vadd.f32 %v2064, %v2250
        %v2271 = vadd.f32 %v2065, %v2253
        %v2272 = vadd.f32 %v2066, %v2255
        %v2273 = vld [vmem:[%s2] sm:$0x1]
        %v2275 = vperm.slane %v2273, 0
        %v2277 = vadd.f32 %v2257, %v2275
        %v2278 = vadd.f32 %v2258, %v2275
        %v2279 = vadd.f32 %v2259, %v2275
        %v2280 = vadd.f32 %v2260, %v2275
        %v2281 = vadd.f32 %v2261, %v2275
        %v2282 = vadd.f32 %v2262, %v2275
        %v2283 = vadd.f32 %v2263, %v2275
        %v2284 = vadd.f32 %v2264, %v2275
        %v2285 = vadd.f32 %v2265, %v2275
        %v2286 = vadd.f32 %v2266, %v2275
        %v2287 = vadd.f32 %v2267, %v2275
        %v2288 = vadd.f32 %v2268, %v2275
        %v2289 = vadd.f32 %v2269, %v2275
        %v2290 = vadd.f32 %v2270, %v2275
        %v2291 = vadd.f32 %v2271, %v2275
        %v2292 = vadd.f32 %v2272, %v2275
        %v2293 = vmax.f32 %v2277, 0.0
        %v2294 = vmax.f32 %v2278, 0.0
        %v2295 = vmax.f32 %v2279, 0.0
        %v2296 = vmax.f32 %v2280, 0.0
        %v2297 = vmax.f32 %v2281, 0.0
        %v2298 = vmax.f32 %v2282, 0.0
        %v2299 = vmax.f32 %v2283, 0.0
        %v2300 = vmax.f32 %v2284, 0.0
        %v2301 = vmax.f32 %v2285, 0.0
        %v2302 = vmax.f32 %v2286, 0.0
        %v2303 = vmax.f32 %v2287, 0.0
        %v2304 = vmax.f32 %v2288, 0.0
        %v2305 = vmax.f32 %v2289, 0.0
        %v2306 = vmax.f32 %v2290, 0.0
        %v2307 = vmax.f32 %v2291, 0.0
        %v2308 = vmax.f32 %v2292, 0.0
        %v2309 = vld [vmem:[#allocation2] sm:$0x1]
        %v2310 = vadd.f32 %v2293, %v2294
        %v2311 = vadd.f32 %v2310, %v2295
        %v2312 = vadd.f32 %v2311, %v2296
        %v2313 = vadd.f32 %v2312, %v2297
        %v2314 = vadd.f32 %v2313, %v2298
        %v2315 = vadd.f32 %v2314, %v2299
        %v2316 = vadd.f32 %v2315, %v2300
        %v2317 = vadd.f32 %v2316, %v2301
        %v2318 = vadd.f32 %v2317, %v2302
        %v2319 = vadd.f32 %v2318, %v2303
        %v2320 = vadd.f32 %v2319, %v2304
        %v2321 = vadd.f32 %v2320, %v2305
        %v2322 = vadd.f32 %v2321, %v2306
        %v2323 = vadd.f32 %v2322, %v2307
        %v2324 = vadd.f32 %v2323, %v2308
        %v2325 = vrot.slane %v2324, 4
        %v2326 = vadd.f32 %v2324, %v2325
        %v2327 = vrot.slane %v2326, 2
        %v2328 = vadd.f32 %v2326, %v2327
        %v2329 = vrot.slane %v2328, 1
        %v2330 = vadd.f32 %v2328, %v2329
        %v2331 = vadd.f32 %v2309, %v2330
        %2332 = vst [vmem:[#allocation2] sm:$0x1] %v2331
        %p2333 = scmp.eq.s32.totalorder %s24, 1
        // Predicated region
        $region45: #{tpu_custom_call.1} parent=39 // pred_check
          %p2334 = pneg %p2333
        $region46: #{tpu_custom_call.1} parent=39 // pred_check_branch
          %2336 = sbr.rel (%p2334) target = $region48
        $region47: #{tpu_custom_call.1} parent=39 // pred_region
          %v2337 = vld [vmem:[#allocation2] sm:$0x1]
          %v2338 = vmul.f32 %v2337, 0.00390625
          %v2339 = vpack.c.bf16 %v2338, %v2338
          %v2340 = vld [vmem:[%s3] sm:$0xf]
          %v2341 = vld [vmem:[%s3 + $0x4] sm:$0xf]
          %v2342 = vld [vmem:[%s3 + $0x8] sm:$0xf]
          %v2343 = vld [vmem:[%s3 + $0xc] sm:$0xf]
          %v2344 = vld [vmem:[%s3 + $0x10] sm:$0xf]
          %v2345 = vld [vmem:[%s3 + $0x14] sm:$0xf]
          %v2346 = vld [vmem:[%s3 + $0x18] sm:$0xf]
          %v2347 = vld [vmem:[%s3 + $0x1c] sm:$0xf]
          %v2348 = vld [vmem:[%s3 + $0x20] sm:$0xf]
          %v2349 = vld [vmem:[%s3 + $0x24] sm:$0xf]
          %v2350 = vld [vmem:[%s3 + $0x28] sm:$0xf]
          %v2351 = vld [vmem:[%s3 + $0x2c] sm:$0xf]
          %v2352 = vld [vmem:[%s3 + $0x30] sm:$0xf]
          %v2353 = vld [vmem:[%s3 + $0x34] sm:$0xf]
          %v2354 = vld [vmem:[%s3 + $0x38] sm:$0xf]
          %v2355 = vld [vmem:[%s3 + $0x3c] sm:$0xf]
          %v2356 = vld [vmem:[%s4] sm:$0x1]
          %v2373 = vunpack.c.l.b16 %v2340
          %v2374 = vunpack.c.l.b16 %v2341
          %v2375 = vunpack.c.l.b16 %v2342
          %v2376 = vunpack.c.l.b16 %v2343
          %v2377 = vunpack.c.l.b16 %v2344
          %v2378 = vunpack.c.l.b16 %v2345
          %v2379 = vunpack.c.l.b16 %v2346
          %v2380 = vunpack.c.l.b16 %v2347
          %v2381 = vunpack.c.l.b16 %v2348
          %v2382 = vunpack.c.l.b16 %v2349
          %v2383 = vunpack.c.l.b16 %v2350
          %v2384 = vunpack.c.l.b16 %v2351
          %v2385 = vunpack.c.l.b16 %v2352
          %v2386 = vunpack.c.l.b16 %v2353
          %v2387 = vunpack.c.l.b16 %v2354
          %v2388 = vunpack.c.l.b16 %v2355
          %v2389 = vpack.c.b16 %v2374, %v2373
          %v2390 = vpack.c.b16 %v2376, %v2375
          %v2391 = vpack.c.b16 %v2378, %v2377
          %v2392 = vpack.c.b16 %v2380, %v2379
          %v2393 = vpack.c.b16 %v2382, %v2381
          %v2394 = vpack.c.b16 %v2384, %v2383
          %v2395 = vpack.c.b16 %v2386, %v2385
          %v2396 = vpack.c.b16 %v2388, %v2387
          %2405 = vmatpush.bf16.msra.mxu0 %v2396
          %2406 = vmatpush.bf16.msra.mxu0 %v2395
          %2407 = vmatpush.bf16.msra.mxu0 %v2394
          %2408 = vmatpush.bf16.msra.mxu0 %v2393
          %2409 = vmatpush.bf16.msra.mxu0 %v2392
          %2410 = vmatpush.bf16.msra.mxu0 %v2391
          %2411 = vmatpush.bf16.msra.mxu0 %v2390
          %2412 = vmatpush.bf16.msra.mxu0 %v2389
          %2413 = vmatmul.bf16.gmra.mxu0 %v2339
          %v2414 = vpop.f32.mrf.mxu0
          %v2415 = vadd.f32 %v2356, %v2414
          %v2416 = vpop.f32.mrf.mxu0
          %2417 = vdwg.mxu0
          %2418 = vst [vmem:[%s228] sm:$0x1] %v2415
        $region48: #{tpu_custom_call.1} parent=39 // pred_fallthru
          _
        %s2419 = sand.u32 %s149, 1
        %s2420 = scalar_lea.sflag [#allocation4], %s2419
        %s2421 = sand.u32 %s149, 1
        %s2422 = scalar_lea.vmem [#allocation3], %s2421
        // Predicated region
        $region49: #{tpu_custom_call.1} parent=39 // pred_check
          %p2423 = pneg %p159
        $region50: #{tpu_custom_call.1} parent=39 // pred_check_branch
          %2425 = sbr.rel (%p2423) target = $region52
        $region51: #{tpu_custom_call.1} parent=39 // pred_region
          %2427 = vsyncadd %s2420, 0
          %s2428 = scalar_lea.hbm %s5, %s23
          %s2430 = sshll.u32 %s2422, 4
          %s2431 = int_to_ptr.vmem [resolvable:$true] %s2430
          %s2432 = sshll.u32 %s2428, 4
          %s2433 = int_to_ptr.hbm [resolvable:$true] %s2432
          %2435 = dma.vmem_to_hbm [thread:$0]  %s2431, 16, %s2433, %s2420
        $region52: #{tpu_custom_call.1} parent=39 // pred_fallthru
          _
      $region40: #{tpu_custom_call.1} parent=5 // pred_fallthru
        _
      %p2436 = scmp.le.s32.totalorder 2, %s14
      // Predicated region
      $region53: #{tpu_custom_call.1} parent=5 // pred_check
        %p2437 = pneg %p2436
      $region54: #{tpu_custom_call.1} parent=5 // pred_check_branch
        %2439 = sbr.rel (%p2437) target = $region56
      $region55: #{tpu_custom_call.1} parent=5 // pred_region
        %s2440 = ssub.s32 %s14, 2
        // Predicated region
        $region57: #{tpu_custom_call.1} parent=55 // pred_check
          %p2441 = pneg %p165
        $region58: #{tpu_custom_call.1} parent=55 // pred_check_branch
          %2443 = sbr.rel (%p2441) target = $region60
        $region59: #{tpu_custom_call.1} parent=55 // pred_region
          %s2444 = sand.u32 %s150, 1
          %s2445 = scalar_lea.sflag [#allocation4], %s2444
          %s2446 = sand.u32 %s150, 1
          %s2447 = scalar_lea.vmem [#allocation3], %s2446
          %2449 = dma.done %s2445, 16
        $region60: #{tpu_custom_call.1} parent=55 // pred_fallthru
          _
      $region56: #{tpu_custom_call.1} parent=5 // pred_fallthru
        _
    $region6: #{tpu_custom_call.1} parent=1 // loop_footer
      %s18 = sadd.s32 1, %s14
    $region7: #{tpu_custom_call.1} parent=1 // loop_footer_branch
      %13 = sbr.rel target = $region3
    $region8: #{tpu_custom_call.1} parent=1 // loop_exit
      _
    %2450 = vsyncpa [#allocation4], 1
    %s2451 = scalar_lea.sflag [#allocation4], 1
    %2452 = vsyncpa %s2451, 1

</llo_original>
